<compile_context>
chip_gen: v5e
topology: v5e:2x2
jax: 0.10.0
libtpu: 0.0.40
codegen_flags: <defaults>
</compile_context>

<pallas_src>
import functools

import jax
import jax.numpy as jnp
from jax.experimental import pallas as pl
from jax.experimental.pallas import tpu as pltpu


BN_EPS = 1e-5                   # nn.BatchNorm2d default eps

NUM_INPUT_FEATURES = 96
NUM_OUTPUT_FEATURES = 32
SKIP_CHANNELS = 4 * NUM_OUTPUT_FEATURES   # so cat channels == 6 * num_output_features


# ----------------------------------------------------------------------------
# Generation dispatch
# ----------------------------------------------------------------------------
def _round_up(x, m):
    return ((x + m - 1) // m) * m


@functools.lru_cache(maxsize=None)
def _vmem_limit_bytes():
    """3/4 of physical VMEM: 48 MiB on v7x (64 MiB/TC), 96 MiB on v5e/v6e (128 MiB)."""
    try:
        cap = int(pltpu.get_tpu_info().vmem_capacity_bytes)
        return min((cap * 3) // 4, 100 * 1024 * 1024)
    except Exception:
        return 48 * 1024 * 1024   # conservative fallback, safe on every generation


@functools.lru_cache(maxsize=None)
def _num_parallel_cores():
    """v5e/v6e expose one TensorCore per device; v7x (and v4/v5p megacore) two."""
    try:
        kind = jax.devices()[0].device_kind.lower()
    except Exception:
        return 2
    single_tc = ("v5 lite", "v5e", "v5lite", "v6 lite", "v6e", "v6lite")
    return 1 if any(t in kind for t in single_tc) else 2


# ----------------------------------------------------------------------------
# Tiling helpers
# ----------------------------------------------------------------------------
def _pad_n(n):
    """Pad an output-channel axis to a multiple of 128; tn=256 when it divides."""
    np_ = _round_up(n, 128)
    tn = 256 if np_ % 256 == 0 else 128
    return np_, tn


def _pad_k(k):
    """Pad a contraction axis to a multiple of 128.  384 dropped: half-filled
    pass on the 2x256x256 MXUs of v6e/v7x."""
    kp = _round_up(k, 128)
    tk = next(t for t in (512, 256, 128) if kp % t == 0)
    return kp, tk


def _pad_m(m):
    """Row tiling, generation-dispatched:
       * 1 TensorCore (v5e/v6e): one big tile — never split M just to make blocks.
       * 2 TensorCores (v7x):    >= 2 'parallel' M blocks, tiles kept large."""
    cores = _num_parallel_cores()
    mp = _round_up(m, 8)
    if cores <= 1:
        tm = mp if mp <= 1024 else 512
    else:
        if mp <= 256:
            tm = mp
        elif mp <= 1024:
            tm = _round_up((mp + 1) // 2, 8)
        else:
            tm = 512
    mp = _round_up(mp, tm)
    return mp, tm


# ----------------------------------------------------------------------------
# Kernel A: conv1 (1x1, no bias) as bf16 matmul + fused BN batch statistics
# ----------------------------------------------------------------------------
def _conv1_stats_kernel_single_k(x_ref, w_ref, y_ref, s1_ref, s2_ref):
    # gk == 1 fast path: no K loop, no f32 accumulator scratch, no acc->y copy.
    y = jnp.dot(x_ref[...], w_ref[...], preferred_element_type=jnp.float32)
    y_ref[...] = y.astype(y_ref.dtype)                 # bf16 store: halves y1 HBM bytes
    # Sublane-aligned partition of rows -> (8, tn) partial sums (no duplicated store).
    p = y.reshape(y.shape[0] // 8, 8, y.shape[1])
    s1_ref[...] = jnp.sum(p, axis=0)
    s2_ref[...] = jnp.sum(p * p, axis=0)


def _conv1_stats_kernel(x_ref, w_ref, y_ref, s1_ref, s2_ref, acc_ref):
    k = pl.program_id(2)

    @pl.when(k == 0)
    def _():
        acc_ref[...] = jnp.zeros_like(acc_ref)

    acc_ref[...] += jnp.dot(x_ref[...], w_ref[...],
                            preferred_element_type=jnp.float32)

    @pl.when(k == pl.num_programs(2) - 1)
    def _():
        y = acc_ref[...]
        y_ref[...] = y.astype(y_ref.dtype)
        p = y.reshape(y.shape[0] // 8, 8, y.shape[1])
        s1_ref[...] = jnp.sum(p, axis=0)
        s2_ref[...] = jnp.sum(p * p, axis=0)


def conv1_with_channel_stats(x_bf16, w_pad, n_out):
    """y = x @ w (no bias), stored bf16, plus per-channel sum / sum-of-squares
    of the f32 matmul result (for training-mode BatchNorm batch statistics).

    x_bf16: (M, K) bf16 activation (cast fused into the resize producer).
    w_pad:  (Kp, Np) bf16 weight, padded/cast once at pack time.
    Returns (y_pad (Mp, Np) bf16, col_sum (n_out,) f32, col_sumsq (n_out,) f32).
    """
    M, K = x_bf16.shape
    Kp, tk = _pad_k(K)
    Np, tn = _pad_n(n_out)
    assert w_pad.shape == (Kp, Np), (w_pad.shape, (Kp, Np))
    Mp, tm = _pad_m(M)

    x_p = jnp.pad(x_bf16, ((0, Mp - M), (0, Kp - K)))
    gm, gn, gk = Mp // tm, Np // tn, Kp // tk

    out_shape = (
        jax.ShapeDtypeStruct((Mp, Np), jnp.bfloat16),
        jax.ShapeDtypeStruct((8 * gm, Np), jnp.float32),
        jax.ShapeDtypeStruct((8 * gm, Np), jnp.float32),
    )
    params = pltpu.CompilerParams(
        dimension_semantics=("parallel", "parallel") + (("arbitrary",) if gk > 1 else ()),
        vmem_limit_bytes=_vmem_limit_bytes(),
    )

    if gk == 1:
        y_pad, s1, s2 = pl.pallas_call(
            _conv1_stats_kernel_single_k,
            out_shape=out_shape,
            grid=(gm, gn),
            in_specs=[
                pl.BlockSpec((tm, Kp), lambda i, j: (i, 0)),
                pl.BlockSpec((Kp, tn), lambda i, j: (0, j)),
            ],
            out_specs=(
                pl.BlockSpec((tm, tn), lambda i, j: (i, j)),
                pl.BlockSpec((8, tn), lambda i, j: (i, j)),
                pl.BlockSpec((8, tn), lambda i, j: (i, j)),
            ),
            compiler_params=params,
        )(x_p, w_pad)
    else:
        y_pad, s1, s2 = pl.pallas_call(
            _conv1_stats_kernel,
            out_shape=out_shape,
            grid=(gm, gn, gk),
            in_specs=[
                pl.BlockSpec((tm, tk), lambda i, j, k: (i, k)),
                pl.BlockSpec((tk, tn), lambda i, j, k: (k, j)),
            ],
            out_specs=(
                pl.BlockSpec((tm, tn), lambda i, j, k: (i, j)),
                pl.BlockSpec((8, tn), lambda i, j, k: (i, j)),
                pl.BlockSpec((8, tn), lambda i, j, k: (i, j)),
            ),
            scratch_shapes=[pltpu.VMEM((tm, tn), jnp.float32)],
            compiler_params=params,
        )(x_p, w_pad)

    # Dense (not strided) host-side reduction over all per-tile partial sums.
    # Padded M rows are zero-filled, so they contribute 0 to both sums.
    col_sum = s1[:, :n_out].sum(axis=0)
    col_sumsq = s2[:, :n_out].sum(axis=0)
    return y_pad, col_sum, col_sumsq


# ----------------------------------------------------------------------------
# Kernel B: BN affine + ReLU + channel-concat + conv2 (1x1, no bias), all fused
# ----------------------------------------------------------------------------
def _bn_relu_concat_conv2_kernel(y1_ref, a_ref, b_ref, skip_ref,
                                 w2a_ref, w2b_ref, o_ref):
    # y1 arrives bf16 (halved HBM traffic); the BN affine + ReLU stay in f32
    # (v5e VPU has no bf16 ALU).  skip arrives f32 and is cast to bf16 here —
    # free VPU filler under the MXU/DMA, and it removes a full host-side cast pass.
    y1 = y1_ref[...].astype(jnp.float32)
    h = jnp.maximum(y1 * a_ref[...] + b_ref[...], 0.0)
    o_ref[...] = (
        jnp.dot(h.astype(jnp.bfloat16), w2a_ref[...],
                preferred_element_type=jnp.float32)
        + jnp.dot(skip_ref[...].astype(jnp.bfloat16), w2b_ref[...],
                  preferred_element_type=jnp.float32)
    )


def bn_relu_concat_conv2(y1_pad, a, b, skip_flat, w2a_pad, w2b_pad, n_out):
    """out = cat([relu(y1*a + b), skip], channel) @ W2  (concat never materialized).

    y1_pad:    (Mp, K1p) bf16, padded output of conv1_with_channel_stats.
    a, b:      (K1,) f32 per-channel affine built from BN batch statistics.
    skip_flat: (M, K2) f32 skip connection (flattened NHWC), cast to bf16 in-kernel.
    w2a_pad:   (K1p, Np) bf16 ; w2b_pad: (K2p, Np) bf16 (pre-padded at pack time).
    Contraction dims are taken full-K per block; for DenseNet channel counts the
    panels fit the per-generation VMEM budget with room to spare.
    """
    Mp, K1p = y1_pad.shape
    K1 = a.shape[0]
    M, K2 = skip_flat.shape
    K2p, Np = w2b_pad.shape
    _, tn = _pad_n(n_out)
    Mp2, tm = _pad_m(M)
    assert Mp2 == Mp, (Mp2, Mp)
    assert w2a_pad.shape == (K1p, Np)

    a_p = jnp.pad(a.astype(jnp.float32), (0, K1p - K1)).reshape(1, K1p)
    b_p = jnp.pad(b.astype(jnp.float32), (0, K1p - K1)).reshape(1, K1p)
    skip_p = jnp.pad(skip_flat, ((0, Mp - M), (0, K2p - K2)))   # stays f32

    out = pl.pallas_call(
        _bn_relu_concat_conv2_kernel,
        out_shape=jax.ShapeDtypeStruct((Mp, Np), jnp.float32),
        grid=(Mp // tm, Np // tn),
        in_specs=[
            pl.BlockSpec((tm, K1p), lambda i, j: (i, 0)),
            pl.BlockSpec((1, K1p), lambda i, j: (0, 0)),
            pl.BlockSpec((1, K1p), lambda i, j: (0, 0)),
            pl.BlockSpec((tm, K2p), lambda i, j: (i, 0)),
            pl.BlockSpec((K1p, tn), lambda i, j: (0, j)),
            pl.BlockSpec((K2p, tn), lambda i, j: (0, j)),
        ],
        out_specs=pl.BlockSpec((tm, tn), lambda i, j: (i, j)),
        compiler_params=pltpu.CompilerParams(
            dimension_semantics=("parallel", "parallel"),
            vmem_limit_bytes=_vmem_limit_bytes(),
        ),
    )(y1_pad, a_p, b_p, skip_p, w2a_pad, w2b_pad)
    return out[:M, :n_out]


# ----------------------------------------------------------------------------
# Bilinear resize (F.interpolate, mode='bilinear', align_corners=False)
# ----------------------------------------------------------------------------
# TODO(synk): the bilinear resize (dynamic gather + lerp) has no clean Pallas
#             equivalent on TPU; it stays in plain-JAX glue on the smallest tensor.
def _resize_coords(in_size, out_size):
    pos = (jnp.arange(out_size, dtype=jnp.float32) + 0.5) * (in_size / out_size) - 0.5
    pos = jnp.clip(pos, 0.0, in_size - 1)
    lo = jnp.floor(pos).astype(jnp.int32)
    hi = jnp.minimum(lo + 1, in_size - 1)
    frac = pos - lo.astype(jnp.float32)
    return lo, hi, frac


def bilinear_resize_nhwc(x, out_h, out_w):
    _, h, w, _ = x.shape
    hl, hh, hf = _resize_coords(h, out_h)
    wl, wh, wf = _resize_coords(w, out_w)
    top = (x[:, hl] * (1.0 - hf)[None, :, None, None]
           + x[:, hh] * hf[None, :, None, None])
    out = (top[:, :, wl] * (1.0 - wf)[None, None, :, None]
           + top[:, :, wh] * wf[None, None, :, None])
    return out


# ----------------------------------------------------------------------------
# Parameters
# ----------------------------------------------------------------------------
def init_params(key, num_input_features, num_output_features, skip_channels):
    k1, k2, k3, k4 = jax.random.split(key, 4)
    c1 = 2 * num_output_features
    c_cat = c1 + skip_channels     # == 6 * num_output_features
    w1 = jax.random.normal(k1, (num_input_features, c1), jnp.float32) / jnp.sqrt(
        float(num_input_features))
    gamma = 1.0 + 0.1 * jax.random.normal(k2, (c1,), jnp.float32)
    beta = 0.1 * jax.random.normal(k3, (c1,), jnp.float32)
    w2 = jax.random.normal(k4, (c_cat, num_output_features), jnp.float32) / jnp.sqrt(
        float(c_cat))
    return dict(w1=w1, gamma=gamma, beta=beta, w2=w2)


def pack_params(params):
    """Pad weights to MXU-friendly shapes and cast to bf16 once (not per call)."""
    w1 = params["w1"]                         # (Cin, C1)
    w2 = params["w2"]                         # (C1 + Cskip, Nout)
    cin, c1 = w1.shape
    nout = w2.shape[1]
    cskip = w2.shape[0] - c1

    kp, _ = _pad_k(cin)
    c1p, _ = _pad_n(c1)
    noutp, _ = _pad_n(nout)
    cskip_p = _round_up(cskip, 128)

    w1_p = jnp.pad(w1, ((0, kp - cin), (0, c1p - c1))).astype(jnp.bfloat16)
    w2a_p = jnp.pad(w2[:c1], ((0, c1p - c1), (0, noutp - nout))).astype(jnp.bfloat16)
    w2b_p = jnp.pad(w2[c1:], ((0, cskip_p - cskip), (0, noutp - nout))).astype(jnp.bfloat16)
    return dict(w1_p=w1_p, w2a_p=w2a_p, w2b_p=w2b_p,
                gamma=params["gamma"], beta=params["beta"])


# ----------------------------------------------------------------------------
# Forward pass
# ----------------------------------------------------------------------------
def transition_up_forward(packed, x_nchw, skip_nchw, num_output_features):
    c1 = packed["gamma"].shape[0]             # == 2 * num_output_features
    n_out = num_output_features

    # NCHW -> NHWC for the whole pipeline.
    x = jnp.transpose(x_nchw, (0, 2, 3, 1)).astype(jnp.float32)
    skip = jnp.transpose(skip_nchw, (0, 2, 3, 1)).astype(jnp.float32)
    n, hs, ws, cskip = skip.shape

    # x = F.interpolate(x, skip.shape[2:], mode='bilinear')  (align_corners=False).
    # The bf16 cast fuses into the resize fusion, so the conv1 input is written
    # to HBM once, already in bf16 (no separate host-side cast pass).
    x = bilinear_resize_nhwc(x, hs, ws).astype(jnp.bfloat16)
    m = n * hs * ws
    x_flat = x.reshape(m, -1)

    # block1.conv1 (1x1, bias=False) with fused per-channel BN batch statistics.
    y1_pad, s, sq = conv1_with_channel_stats(x_flat, packed["w1_p"], c1)

    # block1.norm1 (training-mode batch stats, biased variance) + relu folded
    # into a per-channel affine (a, b).
    mean = s / m
    var = jnp.maximum(sq / m - mean * mean, 0.0)
    a = packed["gamma"] / jnp.sqrt(var + BN_EPS)
    b = packed["beta"] - mean * a

    # relu(bn(y1)) ++ skip  ->  block2.conv2 (1x1, bias=False), all in one kernel.
    skip_flat = skip.reshape(m, cskip)
    out = bn_relu_concat_conv2(y1_pad, a, b, skip_flat,
                               packed["w2a_p"], packed["w2b_p"], n_out)

    out = out.reshape(n, hs, ws, n_out)
    return jnp.transpose(out, (0, 3, 1, 2))   # back to NCHW


# ----------------------------------------------------------------------------
if __name__ == "__main__":
    key = jax.random.PRNGKey(0)
    k_param, k_x, k_skip = jax.random.split(key, 3)

    params = init_params(k_param, NUM_INPUT_FEATURES, NUM_OUTPUT_FEATURES,
                         SKIP_CHANNELS)
    packed = pack_params(params)

    # Low-resolution input + higher-resolution skip connection.  The skip has
    # 4*num_output_features channels so the concatenated conv2 input is
    # 6*num_output_features, exactly as the PyTorch module expects.
    x = jax.random.normal(k_x, (2, NUM_INPUT_FEATURES, 8, 8), jnp.float32)
    skip = jax.random.normal(k_skip, (2, SKIP_CHANNELS, 16, 16), jnp.float32)

    fwd = jax.jit(transition_up_forward, static_argnames="num_output_features")
    out = fwd(packed, x, skip, num_output_features=NUM_OUTPUT_FEATURES)
    jax.block_until_ready(out)

    expected = (2, NUM_OUTPUT_FEATURES, 16, 16)
    assert out.shape == expected, (out.shape, expected)
    assert bool(jnp.all(jnp.isfinite(out)))
    print("KERNEL_OK")
</pallas_src>

<mosaic_0001>
module attributes {stable_mosaic.version = 11 : i64} {
  func.func @_conv1_stats_kernel_single_k(%arg0: i32, %arg1: i32, %arg2: memref<256x128xbf16, #tpu.memory_space<vmem>>, %arg3: memref<128x128xbf16, #tpu.memory_space<vmem>>, %arg4: memref<256x128xbf16, #tpu.memory_space<vmem>>, %arg5: memref<8x128xf32, #tpu.memory_space<vmem>>, %arg6: memref<8x128xf32, #tpu.memory_space<vmem>>) attributes {dimension_semantics = [#tpu.dimension_semantics<parallel>, #tpu.dimension_semantics<parallel>], iteration_bounds = array<i64: 2, 1>, scalar_prefetch = 0 : i64, scratch_operands = 0 : i64, tpu.core_type = #tpu.core_type<tc>, window_params = [{transform_indices = @transform_0, window_bounds = array<i64: 256, 128>}, {transform_indices = @transform_1, window_bounds = array<i64: 128, 128>}, {transform_indices = @transform_2, window_bounds = array<i64: 256, 128>}, {transform_indices = @transform_3, window_bounds = array<i64: 8, 128>}, {transform_indices = @transform_4, window_bounds = array<i64: 8, 128>}]} {
    %c0 = arith.constant 0 : index
    %c0_0 = arith.constant 0 : index
    %0 = vector.load %arg2[%c0, %c0_0] : memref<256x128xbf16, #tpu.memory_space<vmem>>, vector<256x128xbf16>
    %c0_1 = arith.constant 0 : index
    %c0_2 = arith.constant 0 : index
    %1 = vector.load %arg3[%c0_1, %c0_2] : memref<128x128xbf16, #tpu.memory_space<vmem>>, vector<128x128xbf16>
    %cst = arith.constant dense<0.000000e+00> : vector<256x128xf32>
    %2 = tpu.matmul %0, %1, %cst {dimension_numbers = #tpu.dot_dimension_numbers<[1], [0], [0], [1], [0, 0, 1, 1], [], []>} : vector<256x128xbf16>, vector<128x128xbf16>, vector<256x128xf32> -> vector<256x128xf32>
    %3 = arith.truncf %2 : vector<256x128xf32> to vector<256x128xbf16>
    %c0_3 = arith.constant 0 : index
    %c0_4 = arith.constant 0 : index
    %4 = vector.load %arg4[%c0_3, %c0_4] : memref<256x128xbf16, #tpu.memory_space<vmem>>, vector<256x128xbf16>
    tpu.vector_store %arg4[%c0_3, %c0_4], %3 {strides = array<i32>} : memref<256x128xbf16, #tpu.memory_space<vmem>>, vector<256x128xbf16>,
    %5 = vector.shape_cast %2 : vector<256x128xf32> to vector<32x8x128xf32>
    %cst_5 = arith.constant dense<0.000000e+00> : vector<8x128xf32>
    %6 = vector.multi_reduction <add>, %5, %cst_5 [0] : vector<32x8x128xf32> to vector<8x128xf32>
    %c0_6 = arith.constant 0 : index
    %c0_7 = arith.constant 0 : index
    %7 = vector.load %arg5[%c0_6, %c0_7] : memref<8x128xf32, #tpu.memory_space<vmem>>, vector<8x128xf32>
    tpu.vector_store %arg5[%c0_6, %c0_7], %6 {strides = array<i32>} : memref<8x128xf32, #tpu.memory_space<vmem>>, vector<8x128xf32>,
    %8 = arith.mulf %5, %5 : vector<32x8x128xf32>
    %cst_8 = arith.constant dense<0.000000e+00> : vector<8x128xf32>
    %9 = vector.multi_reduction <add>, %8, %cst_8 [0] : vector<32x8x128xf32> to vector<8x128xf32>
    %c0_9 = arith.constant 0 : index
    %c0_10 = arith.constant 0 : index
    %10 = vector.load %arg6[%c0_9, %c0_10] : memref<8x128xf32, #tpu.memory_space<vmem>>, vector<8x128xf32>
    tpu.vector_store %arg6[%c0_9, %c0_10], %9 {strides = array<i32>} : memref<8x128xf32, #tpu.memory_space<vmem>>, vector<8x128xf32>,
    return
  }
  func.func @transform_0(%arg0: i32, %arg1: i32) -> (i32, i32) {
    %c0_i32 = arith.constant 0 : i32
    %c0_i32_0 = arith.constant 0 : i32
    return %arg0, %c0_i32 : i32, i32
  }
  func.func @transform_1(%arg0: i32, %arg1: i32) -> (i32, i32) {
    %c0_i32 = arith.constant 0 : i32
    %c0_i32_0 = arith.constant 0 : i32
    return %c0_i32, %arg1 : i32, i32
  }
  func.func @transform_2(%arg0: i32, %arg1: i32) -> (i32, i32) {
    %c0_i32 = arith.constant 0 : i32
    return %arg0, %arg1 : i32, i32
  }
  func.func @transform_3(%arg0: i32, %arg1: i32) -> (i32, i32) {
    %c0_i32 = arith.constant 0 : i32
    return %arg0, %arg1 : i32, i32
  }
  func.func @transform_4(%arg0: i32, %arg1: i32) -> (i32, i32) {
    %c0_i32 = arith.constant 0 : i32
    return %arg0, %arg1 : i32, i32
  }
}

module attributes {stable_mosaic.version = 11 : i64} {
  func.func @_bn_relu_concat_conv2_kernel(%arg0: i32, %arg1: i32, %arg2: memref<256x128xbf16, #tpu.memory_space<vmem>>, %arg3: memref<1x128xf32, #tpu.memory_space<vmem>>, %arg4: memref<1x128xf32, #tpu.memory_space<vmem>>, %arg5: memref<256x128xf32, #tpu.memory_space<vmem>>, %arg6: memref<128x128xbf16, #tpu.memory_space<vmem>>, %arg7: memref<128x128xbf16, #tpu.memory_space<vmem>>, %arg8: memref<256x128xf32, #tpu.memory_space<vmem>>) attributes {dimension_semantics = [#tpu.dimension_semantics<parallel>, #tpu.dimension_semantics<parallel>], iteration_bounds = array<i64: 2, 1>, scalar_prefetch = 0 : i64, scratch_operands = 0 : i64, tpu.core_type = #tpu.core_type<tc>, window_params = [{transform_indices = @transform_0, window_bounds = array<i64: 256, 128>}, {pipeline_mode = #tpu.pipeline_mode<synchronous>, transform_indices = @transform_1, window_bounds = array<i64: 1, 128>}, {pipeline_mode = #tpu.pipeline_mode<synchronous>, transform_indices = @transform_2, window_bounds = array<i64: 1, 128>}, {transform_indices = @transform_3, window_bounds = array<i64: 256, 128>}, {transform_indices = @transform_4, window_bounds = array<i64: 128, 128>}, {transform_indices = @transform_5, window_bounds = array<i64: 128, 128>}, {transform_indices = @transform_6, window_bounds = array<i64: 256, 128>}]} {
    %c0 = arith.constant 0 : index
    %c0_0 = arith.constant 0 : index
    %0 = vector.load %arg2[%c0, %c0_0] : memref<256x128xbf16, #tpu.memory_space<vmem>>, vector<256x128xbf16>
    %1 = arith.extf %0 : vector<256x128xbf16> to vector<256x128xf32>
    %c0_1 = arith.constant 0 : index
    %c0_2 = arith.constant 0 : index
    %2 = vector.load %arg3[%c0_1, %c0_2] : memref<1x128xf32, #tpu.memory_space<vmem>>, vector<1x128xf32>
    %3 = vector.broadcast %2 : vector<1x128xf32> to vector<256x128xf32>
    %4 = arith.mulf %1, %3 : vector<256x128xf32>
    %c0_3 = arith.constant 0 : index
    %c0_4 = arith.constant 0 : index
    %5 = vector.load %arg4[%c0_3, %c0_4] : memref<1x128xf32, #tpu.memory_space<vmem>>, vector<1x128xf32>
    %6 = vector.broadcast %5 : vector<1x128xf32> to vector<256x128xf32>
    %7 = arith.addf %4, %6 : vector<256x128xf32>
    %cst = arith.constant 0.000000e+00 : f32
    %8 = vector.broadcast %cst : f32 to vector<256x128xf32>
    %9 = arith.maximumf %7, %8 : vector<256x128xf32>
    %10 = arith.truncf %9 : vector<256x128xf32> to vector<256x128xbf16>
    %c0_5 = arith.constant 0 : index
    %c0_6 = arith.constant 0 : index
    %11 = vector.load %arg6[%c0_5, %c0_6] : memref<128x128xbf16, #tpu.memory_space<vmem>>, vector<128x128xbf16>
    %cst_7 = arith.constant dense<0.000000e+00> : vector<256x128xf32>
    %12 = tpu.matmul %10, %11, %cst_7 {dimension_numbers = #tpu.dot_dimension_numbers<[1], [0], [0], [1], [0, 0, 1, 1], [], []>} : vector<256x128xbf16>, vector<128x128xbf16>, vector<256x128xf32> -> vector<256x128xf32>
    %c0_8 = arith.constant 0 : index
    %c0_9 = arith.constant 0 : index
    %13 = vector.load %arg5[%c0_8, %c0_9] : memref<256x128xf32, #tpu.memory_space<vmem>>, vector<256x128xf32>
    %14 = arith.truncf %13 : vector<256x128xf32> to vector<256x128xbf16>
    %c0_10 = arith.constant 0 : index
    %c0_11 = arith.constant 0 : index
    %15 = vector.load %arg7[%c0_10, %c0_11] : memref<128x128xbf16, #tpu.memory_space<vmem>>, vector<128x128xbf16>
    %cst_12 = arith.constant dense<0.000000e+00> : vector<256x128xf32>
    %16 = tpu.matmul %14, %15, %cst_12 {dimension_numbers = #tpu.dot_dimension_numbers<[1], [0], [0], [1], [0, 0, 1, 1], [], []>} : vector<256x128xbf16>, vector<128x128xbf16>, vector<256x128xf32> -> vector<256x128xf32>
    %17 = arith.addf %12, %16 : vector<256x128xf32>
    %c0_13 = arith.constant 0 : index
    %c0_14 = arith.constant 0 : index
    %18 = vector.load %arg8[%c0_13, %c0_14] : memref<256x128xf32, #tpu.memory_space<vmem>>, vector<256x128xf32>
    tpu.vector_store %arg8[%c0_13, %c0_14], %17 {strides = array<i32>} : memref<256x128xf32, #tpu.memory_space<vmem>>, vector<256x128xf32>,
    return
  }
  func.func @transform_0(%arg0: i32, %arg1: i32) -> (i32, i32) {
    %c0_i32 = arith.constant 0 : i32
    %c0_i32_0 = arith.constant 0 : i32
    return %arg0, %c0_i32 : i32, i32
  }
  func.func @transform_1(%arg0: i32, %arg1: i32) -> (i32, i32) {
    %c0_i32 = arith.constant 0 : i32
    %c0_i32_0 = arith.constant 0 : i32
    %c0_i32_1 = arith.constant 0 : i32
    return %c0_i32, %c0_i32_0 : i32, i32
  }
  func.func @transform_2(%arg0: i32, %arg1: i32) -> (i32, i32) {
    %c0_i32 = arith.constant 0 : i32
    %c0_i32_0 = arith.constant 0 : i32
    %c0_i32_1 = arith.constant 0 : i32
    return %c0_i32, %c0_i32_0 : i32, i32
  }
  func.func @transform_3(%arg0: i32, %arg1: i32) -> (i32, i32) {
    %c0_i32 = arith.constant 0 : i32
    %c0_i32_0 = arith.constant 0 : i32
    return %arg0, %c0_i32 : i32, i32
  }
  func.func @transform_4(%arg0: i32, %arg1: i32) -> (i32, i32) {
    %c0_i32 = arith.constant 0 : i32
    %c0_i32_0 = arith.constant 0 : i32
    return %c0_i32, %arg1 : i32, i32
  }
  func.func @transform_5(%arg0: i32, %arg1: i32) -> (i32, i32) {
    %c0_i32 = arith.constant 0 : i32
    %c0_i32_0 = arith.constant 0 : i32
    return %c0_i32, %arg1 : i32, i32
  }
  func.func @transform_6(%arg0: i32, %arg1: i32) -> (i32, i32) {
    %c0_i32 = arith.constant 0 : i32
    return %arg0, %arg1 : i32, i32
  }
}

</mosaic_0001>

<llo_original>
// kernel: transition_up_forward.2
$region0: #{transition_up_forward.2}
  #allocation0 [shape = 'u32[]', space=smem, size = 0x4, offset = 0x4, fixed_abs, tag = 'smem constant byte address 0x4 - core index']
  #allocation1 [shape = 'u32[72,128]{1,0:T(1,128)}', space=vmem, size = 0x9000, scoped, tag = 'internal scratch']
  %s0 = inlined_call_operand.vmem [shape: bf16[512,128], index: 0, kind: input, shape index: {}]
  %s1 = inlined_call_operand.vmem [shape: bf16[128,128], index: 1, kind: input, shape index: {}]
  %s2 = inlined_call_operand.vmem [shape: bf16[512,128], index: 2, kind: output, shape index: {0}]
  %s3 = inlined_call_operand.vmem [shape: f32[16,128], index: 3, kind: output, shape index: {1}]
  %s4 = inlined_call_operand.vmem [shape: f32[16,128], index: 4, kind: output, shape index: {2}]
  %5 = xla_tuple %s2, %s3, %s4
  %s6 = sld [smem:[#allocation0]]
  $region57: #{transition_up_forward.2} parent=0
    _
  %s8 = ssub.s32 1, %s6
  %s9 = scalar_select 0, %s8, %s6
  loop: start=0, step=1, limit=4
  $region2: #{transition_up_forward.2} parent=0 // loop_pre_header
    _
  $region3: #{transition_up_forward.2} parent=0 // loop_header
    %s11 = sphi 0, %s15
    %p12 = scmp.ge.s32.totalorder %s11, 4
    %s18 = sphi 0, %s30
    %s19 = sphi 0, %s26
    %s20 = sphi 0, %s18
    %s21 = sphi 0, %s19
    %s22 = sphi 0, %s20
    %s23 = sphi 0, %s21
    %s33 = sphi 0, %s35
    %s36 = sphi 0, %s33
    %s37 = sphi 0, %s36
    %s53 = sphi 0, %s37
    %s59 = sphi 0, %s61
    %s62 = sphi 0, %s59
    %s63 = sphi 0, %s62
    %s79 = sphi 0, %s63
    %s87 = sphi 0, %s89
    %s90 = sphi 0, %s87
    %s91 = sphi 0, %s90
    %s107 = sphi 0, %s91
    %s115 = sphi 0, %s117
    %s118 = sphi 0, %s115
    %s119 = sphi 0, %s118
    %s135 = sphi 0, %s119
    %s143 = sphi 0, %s145
    %s146 = sphi 0, %s143
    %s147 = sphi 0, %s146
    %s163 = sphi 0, %s147
  $region4: #{transition_up_forward.2} parent=0 // loop_header_branch
    %14 = sbr.rel (%p12) target = $region8
  $region5: #{transition_up_forward.2} parent=0 // loop_body
    %s16 = ssub.s32 %s11, 1
    %s17 = ssub.s32 %s11, 2
    %s24 = sadd.s32 1, %s19
    %p25 = scmp.ge.s32.totalorder %s24, 1
    %s26 = scalar_select %p25, 0, %s24
    %s27 = sadd.s32 1, %s18
    %s28 = scalar_select %p25, %s27, %s18
    %p29 = scmp.ge.s32.totalorder %s28, 2
    %s30 = scalar_select %p29, 0, %s28
    %s31 = ssub.s32 %s18, %s30
    %p32 = scmp.eq.s32.totalorder %s31, 0
    %s34 = sadd.s32 %s33, 1
    %s35 = scalar_select %p32, %s33, %s34
    %p38 = pneg %p32
    %p39 = scmp.eq.s32.totalorder %s11, 1
    %p40 = por %p38, %p39
    %p41 = scmp.ne.s32.totalorder %s33, %s36
    %p42 = scmp.eq.s32.totalorder %s11, 0
    %p43 = por %p41, %p42
    %p44 = scmp.ne.s32.totalorder %s33, %s36
    %p45 = scmp.eq.s32.totalorder %s16, 1
    %p46 = por %p44, %p45
    %p47 = scmp.ne.s32.totalorder %s36, %s37
    %p48 = scmp.eq.s32.totalorder %s16, 0
    %p49 = por %p47, %p48
    %p50 = scmp.ne.s32.totalorder %s36, %s37
    %p51 = scmp.eq.s32.totalorder %s17, 1
    %p52 = por %p50, %p51
    %p54 = scmp.ne.s32.totalorder %s37, %s53
    %p55 = scmp.eq.s32.totalorder %s17, 0
    %p56 = por %p54, %p55
    %s57 = ssub.s32 %s19, %s26
    %p58 = scmp.eq.s32.totalorder %s57, 0
    %s60 = sadd.s32 %s59, 1
    %s61 = scalar_select %p58, %s59, %s60
    %p64 = pneg %p58
    %p65 = scmp.eq.s32.totalorder %s11, 1
    %p66 = por %p64, %p65
    %p67 = scmp.ne.s32.totalorder %s59, %s62
    %p68 = scmp.eq.s32.totalorder %s11, 0
    %p69 = por %p67, %p68
    %p70 = scmp.ne.s32.totalorder %s59, %s62
    %p71 = scmp.eq.s32.totalorder %s16, 1
    %p72 = por %p70, %p71
    %p73 = scmp.ne.s32.totalorder %s62, %s63
    %p74 = scmp.eq.s32.totalorder %s16, 0
    %p75 = por %p73, %p74
    %p76 = scmp.ne.s32.totalorder %s62, %s63
    %p77 = scmp.eq.s32.totalorder %s17, 1
    %p78 = por %p76, %p77
    %p80 = scmp.ne.s32.totalorder %s63, %s79
    %p81 = scmp.eq.s32.totalorder %s17, 0
    %p82 = por %p80, %p81
    %s83 = ssub.s32 %s18, %s30
    %s84 = ssub.s32 %s19, %s26
    %s85 = sor.u32 %s83, %s84
    %p86 = scmp.eq.s32.totalorder %s85, 0
    %s88 = sadd.s32 %s87, 1
    %s89 = scalar_select %p86, %s87, %s88
    %p92 = pneg %p86
    %p93 = scmp.eq.s32.totalorder %s11, 1
    %p94 = por %p92, %p93
    %p95 = scmp.ne.s32.totalorder %s87, %s90
    %p96 = scmp.eq.s32.totalorder %s11, 0
    %p97 = por %p95, %p96
    %p98 = scmp.ne.s32.totalorder %s87, %s90
    %p99 = scmp.eq.s32.totalorder %s16, 1
    %p100 = por %p98, %p99
    %p101 = scmp.ne.s32.totalorder %s90, %s91
    %p102 = scmp.eq.s32.totalorder %s16, 0
    %p103 = por %p101, %p102
    %p104 = scmp.ne.s32.totalorder %s90, %s91
    %p105 = scmp.eq.s32.totalorder %s17, 1
    %p106 = por %p104, %p105
    %p108 = scmp.ne.s32.totalorder %s91, %s107
    %p109 = scmp.eq.s32.totalorder %s17, 0
    %p110 = por %p108, %p109
    %s111 = ssub.s32 %s18, %s30
    %s112 = ssub.s32 %s19, %s26
    %s113 = sor.u32 %s111, %s112
    %p114 = scmp.eq.s32.totalorder %s113, 0
    %s116 = sadd.s32 %s115, 1
    %s117 = scalar_select %p114, %s115, %s116
    %p120 = pneg %p114
    %p121 = scmp.eq.s32.totalorder %s11, 1
    %p122 = por %p120, %p121
    %p123 = scmp.ne.s32.totalorder %s115, %s118
    %p124 = scmp.eq.s32.totalorder %s11, 0
    %p125 = por %p123, %p124
    %p126 = scmp.ne.s32.totalorder %s115, %s118
    %p127 = scmp.eq.s32.totalorder %s16, 1
    %p128 = por %p126, %p127
    %p129 = scmp.ne.s32.totalorder %s118, %s119
    %p130 = scmp.eq.s32.totalorder %s16, 0
    %p131 = por %p129, %p130
    %p132 = scmp.ne.s32.totalorder %s118, %s119
    %p133 = scmp.eq.s32.totalorder %s17, 1
    %p134 = por %p132, %p133
    %p136 = scmp.ne.s32.totalorder %s119, %s135
    %p137 = scmp.eq.s32.totalorder %s17, 0
    %p138 = por %p136, %p137
    %s139 = ssub.s32 %s18, %s30
    %s140 = ssub.s32 %s19, %s26
    %s141 = sor.u32 %s139, %s140
    %p142 = scmp.eq.s32.totalorder %s141, 0
    %s144 = sadd.s32 %s143, 1
    %s145 = scalar_select %p142, %s143, %s144
    %p148 = pneg %p142
    %p149 = scmp.eq.s32.totalorder %s11, 1
    %p150 = por %p148, %p149
    %p151 = scmp.ne.s32.totalorder %s143, %s146
    %p152 = scmp.eq.s32.totalorder %s11, 0
    %p153 = por %p151, %p152
    %p154 = scmp.ne.s32.totalorder %s143, %s146
    %p155 = scmp.eq.s32.totalorder %s16, 1
    %p156 = por %p154, %p155
    %p157 = scmp.ne.s32.totalorder %s146, %s147
    %p158 = scmp.eq.s32.totalorder %s16, 0
    %p159 = por %p157, %p158
    %p160 = scmp.ne.s32.totalorder %s146, %s147
    %p161 = scmp.eq.s32.totalorder %s17, 1
    %p162 = por %p160, %p161
    %p164 = scmp.ne.s32.totalorder %s147, %s163
    %p165 = scmp.eq.s32.totalorder %s17, 0
    %p166 = por %p164, %p165
    %p167 = scmp.le.s32.totalorder 1, %s11
    %p168 = scmp.lt.s32.totalorder %s11, 3
    %p169 = pnand %p167, %p168
    %p170 = pneg %p169
    // Predicated region
    $region9: #{transition_up_forward.2} parent=5 // pred_check
      _
    $region10: #{transition_up_forward.2} parent=5 // pred_check_branch
      %172 = sbr.rel (%p169) target = $region12
    $region11: #{transition_up_forward.2} parent=5 // pred_region
      %s173 = ssub.s32 %s11, 1
      // Predicated region
      $region13: #{transition_up_forward.2} parent=11 // pred_check
        %p174 = pneg %p75
      $region14: #{transition_up_forward.2} parent=11 // pred_check_branch
        %176 = sbr.rel (%p174) target = $region16
      $region15: #{transition_up_forward.2} parent=11 // pred_region
        %p177 = scmp.lt.s32.totalorder %s21, 0
        %s178 = scalar_select %p177, %s21, 0
        %s179 = smul.addr %s178, 4
        %s180 = scalar_lea.vmem %s1, %s179
      $region16: #{transition_up_forward.2} parent=11 // pred_fallthru
        _
    $region12: #{transition_up_forward.2} parent=5 // pred_fallthru
      _
    %p181 = scmp.lt.s32.totalorder %s11, 2
    // Predicated region
    $region17: #{transition_up_forward.2} parent=5 // pred_check
      %p182 = pneg %p181
    $region18: #{transition_up_forward.2} parent=5 // pred_check_branch
      %184 = sbr.rel (%p182) target = $region20
    $region19: #{transition_up_forward.2} parent=5 // pred_region
      // Predicated region
      $region21: #{transition_up_forward.2} parent=19 // pred_check
        %p185 = pneg %p43
      $region22: #{transition_up_forward.2} parent=19 // pred_check_branch
        %187 = sbr.rel (%p185) target = $region24
      $region23: #{transition_up_forward.2} parent=19 // pred_region
        %s188 = smul.u32 32, %s18
        %p189 = scmp.lt.s32.totalorder %s188, 63
        %s190 = scalar_select %p189, %s188, 63
        %s191 = smul.addr %s190, 4
        %s192 = scalar_lea.vmem %s0, %s191
        %s193 = smul.u32 32, %s18
      $region24: #{transition_up_forward.2} parent=19 // pred_fallthru
        _
    $region20: #{transition_up_forward.2} parent=5 // pred_fallthru
      _
    %p194 = scmp.le.s32.totalorder 1, %s11
    %p195 = scmp.lt.s32.totalorder %s11, 3
    %p196 = pnand %p194, %p195
    %p197 = pneg %p196
    // Predicated region
    $region25: #{transition_up_forward.2} parent=5 // pred_check
      _
    $region26: #{transition_up_forward.2} parent=5 // pred_check_branch
      %199 = sbr.rel (%p196) target = $region28
    $region27: #{transition_up_forward.2} parent=5 // pred_region
      %s200 = ssub.s32 %s11, 1
      %s201 = smul.u32 32, %s20
      %p202 = scmp.lt.s32.totalorder %s201, 63
      %s203 = scalar_select %p202, %s201, 63
      %s204 = smul.addr %s203, 4
      %s205 = scalar_lea.vmem %s0, %s204
      %p206 = pneg %p49
      %p207 = pneg %p46
      %p208 = scmp.lt.s32.totalorder %s21, 0
      %s209 = scalar_select %p208, %s21, 0
      %s210 = smul.addr %s209, 4
      %s211 = scalar_lea.vmem %s1, %s210
      %p212 = pneg %p75
      %p213 = pneg %p72
      %p214 = pneg %p103
      %p215 = pneg %p100
      %s216 = smul.u32 32, %s20
      %p217 = scmp.lt.s32.totalorder %s216, 63
      %s218 = scalar_select %p217, %s216, 63
      %p219 = scmp.lt.s32.totalorder %s21, 0
      %s220 = scalar_select %p219, %s21, 0
      %s221 = sadd.s32 %s220, %s218
      %s222 = smul.addr %s221, 4
      %s223 = scalar_lea.vmem %s2, %s222
      %p224 = pneg %p131
      %p225 = pneg %p128
      %p226 = scmp.lt.s32.totalorder %s20, 1
      %s227 = scalar_select %p226, %s20, 1
      %p228 = scmp.lt.s32.totalorder %s21, 0
      %s229 = scalar_select %p228, %s21, 0
      %s230 = sadd.s32 %s229, %s227
      %s231 = smul.addr %s230, 8
      %s232 = scalar_lea.vmem %s3, %s231
      %p233 = pneg %p159
      %p234 = pneg %p156
      %p235 = scmp.lt.s32.totalorder %s20, 1
      %s236 = scalar_select %p235, %s20, 1
      %p237 = scmp.lt.s32.totalorder %s21, 0
      %s238 = scalar_select %p237, %s21, 0
      %s239 = sadd.s32 %s238, %s236
      %s240 = smul.addr %s239, 8
      %s241 = scalar_lea.vmem %s4, %s240
      %s242 = smul.u32 32, %s20
      %p243 = scmp.lt.s32.totalorder %s242, 63
      %s244 = scalar_select %p243, %s242, 63
      %s245 = smul.addr %s244, 4
      %s246 = scalar_lea.vmem %s0, %s245
      %s247 = smul.u32 32, %s20
      %p248 = scmp.lt.s32.totalorder %s21, 0
      %s249 = scalar_select %p248, %s21, 0
      %s250 = smul.addr %s249, 4
      %s251 = scalar_lea.vmem %s1, %s250
      %s252 = smul.u32 32, %s20
      %p253 = scmp.lt.s32.totalorder %s252, 63
      %s254 = scalar_select %p253, %s252, 63
      %p255 = scmp.lt.s32.totalorder %s21, 0
      %s256 = scalar_select %p255, %s21, 0
      %s257 = sadd.s32 %s256, %s254
      %s258 = smul.addr %s257, 4
      %s259 = scalar_lea.vmem %s2, %s258
      %s260 = smul.u32 32, %s20
      %p261 = scmp.lt.s32.totalorder %s20, 1
      %s262 = scalar_select %p261, %s20, 1
      %p263 = scmp.lt.s32.totalorder %s21, 0
      %s264 = scalar_select %p263, %s21, 0
      %s265 = sadd.s32 %s264, %s262
      %s266 = smul.addr %s265, 8
      %s267 = scalar_lea.vmem %s3, %s266
      %p268 = scmp.lt.s32.totalorder %s20, 1
      %s269 = scalar_select %p268, %s20, 1
      %p270 = scmp.lt.s32.totalorder %s21, 0
      %s271 = scalar_select %p270, %s21, 0
      %s272 = sadd.s32 %s271, %s269
      %s273 = smul.addr %s272, 8
      %s274 = scalar_lea.vmem %s4, %s273
      %v275 = vld [vmem:[%s246] sm:$0xf]
      %v276 = vld [vmem:[%s246 + $0x4] sm:$0xf]
      %v277 = vld [vmem:[%s246 + $0x8] sm:$0xf]
      %v278 = vld [vmem:[%s246 + $0xc] sm:$0xf]
      %v279 = vld [vmem:[%s246 + $0x10] sm:$0xf]
      %v280 = vld [vmem:[%s246 + $0x14] sm:$0xf]
      %v281 = vld [vmem:[%s246 + $0x18] sm:$0xf]
      %v282 = vld [vmem:[%s246 + $0x1c] sm:$0xf]
      %v283 = vld [vmem:[%s246 + $0x20] sm:$0xf]
      %v284 = vld [vmem:[%s246 + $0x24] sm:$0xf]
      %v285 = vld [vmem:[%s246 + $0x28] sm:$0xf]
      %v286 = vld [vmem:[%s246 + $0x2c] sm:$0xf]
      %v287 = vld [vmem:[%s246 + $0x30] sm:$0xf]
      %v288 = vld [vmem:[%s246 + $0x34] sm:$0xf]
      %v289 = vld [vmem:[%s246 + $0x38] sm:$0xf]
      %v290 = vld [vmem:[%s246 + $0x3c] sm:$0xf]
      %v291 = vld [vmem:[%s246 + $0x40] sm:$0xf]
      %v292 = vld [vmem:[%s246 + $0x44] sm:$0xf]
      %v293 = vld [vmem:[%s246 + $0x48] sm:$0xf]
      %v294 = vld [vmem:[%s246 + $0x4c] sm:$0xf]
      %v295 = vld [vmem:[%s246 + $0x50] sm:$0xf]
      %v296 = vld [vmem:[%s246 + $0x54] sm:$0xf]
      %v297 = vld [vmem:[%s246 + $0x58] sm:$0xf]
      %v298 = vld [vmem:[%s246 + $0x5c] sm:$0xf]
      %v299 = vld [vmem:[%s246 + $0x60] sm:$0xf]
      %v300 = vld [vmem:[%s246 + $0x64] sm:$0xf]
      %v301 = vld [vmem:[%s246 + $0x68] sm:$0xf]
      %v302 = vld [vmem:[%s246 + $0x6c] sm:$0xf]
      %v303 = vld [vmem:[%s246 + $0x70] sm:$0xf]
      %v304 = vld [vmem:[%s246 + $0x74] sm:$0xf]
      %v305 = vld [vmem:[%s246 + $0x78] sm:$0xf]
      %v306 = vld [vmem:[%s246 + $0x7c] sm:$0xf]
      %v307 = vld [vmem:[%s251] sm:$0xf]
      %v308 = vld [vmem:[%s251 + $0x4] sm:$0xf]
      %v309 = vld [vmem:[%s251 + $0x8] sm:$0xf]
      %v310 = vld [vmem:[%s251 + $0xc] sm:$0xf]
      %v311 = vld [vmem:[%s251 + $0x10] sm:$0xf]
      %v312 = vld [vmem:[%s251 + $0x14] sm:$0xf]
      %v313 = vld [vmem:[%s251 + $0x18] sm:$0xf]
      %v314 = vld [vmem:[%s251 + $0x1c] sm:$0xf]
      %v315 = vld [vmem:[%s251 + $0x20] sm:$0xf]
      %v316 = vld [vmem:[%s251 + $0x24] sm:$0xf]
      %v317 = vld [vmem:[%s251 + $0x28] sm:$0xf]
      %v318 = vld [vmem:[%s251 + $0x2c] sm:$0xf]
      %v319 = vld [vmem:[%s251 + $0x30] sm:$0xf]
      %v320 = vld [vmem:[%s251 + $0x34] sm:$0xf]
      %v321 = vld [vmem:[%s251 + $0x38] sm:$0xf]
      %v322 = vld [vmem:[%s251 + $0x3c] sm:$0xf]
      %v355 = vunpack.c.l.b16 %v275
      %v356 = vunpack.c.l.b16 %v276
      %v357 = vunpack.c.l.b16 %v277
      %v358 = vunpack.c.l.b16 %v278
      %v359 = vunpack.c.l.b16 %v279
      %v360 = vunpack.c.l.b16 %v280
      %v361 = vunpack.c.l.b16 %v281
      %v362 = vunpack.c.l.b16 %v282
      %v363 = vunpack.c.l.b16 %v283
      %v364 = vunpack.c.l.b16 %v284
      %v365 = vunpack.c.l.b16 %v285
      %v366 = vunpack.c.l.b16 %v286
      %v367 = vunpack.c.l.b16 %v287
      %v368 = vunpack.c.l.b16 %v288
      %v369 = vunpack.c.l.b16 %v289
      %v370 = vunpack.c.l.b16 %v290
      %v371 = vunpack.c.l.b16 %v291
      %v372 = vunpack.c.l.b16 %v292
      %v373 = vunpack.c.l.b16 %v293
      %v374 = vunpack.c.l.b16 %v294
      %v375 = vunpack.c.l.b16 %v295
      %v376 = vunpack.c.l.b16 %v296
      %v377 = vunpack.c.l.b16 %v297
      %v378 = vunpack.c.l.b16 %v298
      %v379 = vunpack.c.l.b16 %v299
      %v380 = vunpack.c.l.b16 %v300
      %v381 = vunpack.c.l.b16 %v301
      %v382 = vunpack.c.l.b16 %v302
      %v383 = vunpack.c.l.b16 %v303
      %v384 = vunpack.c.l.b16 %v304
      %v385 = vunpack.c.l.b16 %v305
      %v386 = vunpack.c.l.b16 %v306
      %v387 = vpack.c.b16 %v356, %v355
      %v388 = vpack.c.b16 %v358, %v357
      %v389 = vpack.c.b16 %v360, %v359
      %v390 = vpack.c.b16 %v362, %v361
      %v391 = vpack.c.b16 %v364, %v363
      %v392 = vpack.c.b16 %v366, %v365
      %v393 = vpack.c.b16 %v368, %v367
      %v394 = vpack.c.b16 %v370, %v369
      %v395 = vpack.c.b16 %v372, %v371
      %v396 = vpack.c.b16 %v374, %v373
      %v397 = vpack.c.b16 %v376, %v375
      %v398 = vpack.c.b16 %v378, %v377
      %v399 = vpack.c.b16 %v380, %v379
      %v400 = vpack.c.b16 %v382, %v381
      %v401 = vpack.c.b16 %v384, %v383
      %v402 = vpack.c.b16 %v386, %v385
      %v435 = vunpack.c.l.b16 %v307
      %v436 = vunpack.c.l.b16 %v308
      %v437 = vunpack.c.l.b16 %v309
      %v438 = vunpack.c.l.b16 %v310
      %v439 = vunpack.c.l.b16 %v311
      %v440 = vunpack.c.l.b16 %v312
      %v441 = vunpack.c.l.b16 %v313
      %v442 = vunpack.c.l.b16 %v314
      %v443 = vunpack.c.l.b16 %v315
      %v444 = vunpack.c.l.b16 %v316
      %v445 = vunpack.c.l.b16 %v317
      %v446 = vunpack.c.l.b16 %v318
      %v447 = vunpack.c.l.b16 %v319
      %v448 = vunpack.c.l.b16 %v320
      %v449 = vunpack.c.l.b16 %v321
      %v450 = vunpack.c.l.b16 %v322
      %v451 = vpack.c.b16 %v436, %v435
      %v452 = vpack.c.b16 %v438, %v437
      %v453 = vpack.c.b16 %v440, %v439
      %v454 = vpack.c.b16 %v442, %v441
      %v455 = vpack.c.b16 %v444, %v443
      %v456 = vpack.c.b16 %v446, %v445
      %v457 = vpack.c.b16 %v448, %v447
      %v458 = vpack.c.b16 %v450, %v449
      %467 = vmatpush.bf16.msra.mxu0 %v458
      %468 = vmatpush.bf16.msra.mxu0 %v457
      %469 = vmatpush.bf16.msra.mxu0 %v456
      %470 = vmatpush.bf16.msra.mxu0 %v455
      %471 = vmatpush.bf16.msra.mxu0 %v454
      %472 = vmatpush.bf16.msra.mxu0 %v453
      %473 = vmatpush.bf16.msra.mxu0 %v452
      %474 = vmatpush.bf16.msra.mxu0 %v451
      %475 = vmatmul.bf16.gmra.mxu0 %v387
      %v476 = vpop.f32.mrf.mxu0
      %v477 = vadd.f32 0.0, %v476
      %v478 = vpop.f32.mrf.mxu0
      %v479 = vadd.f32 0.0, %v478
      %480 = vmatmul.bf16.gmra.mxu0 %v388
      %v481 = vpop.f32.mrf.mxu0
      %v482 = vadd.f32 0.0, %v481
      %v483 = vpop.f32.mrf.mxu0
      %v484 = vadd.f32 0.0, %v483
      %485 = vmatmul.bf16.gmra.mxu0 %v389
      %v486 = vpop.f32.mrf.mxu0
      %v487 = vadd.f32 0.0, %v486
      %v488 = vpop.f32.mrf.mxu0
      %v489 = vadd.f32 0.0, %v488
      %490 = vmatmul.bf16.gmra.mxu0 %v390
      %v491 = vpop.f32.mrf.mxu0
      %v492 = vadd.f32 0.0, %v491
      %v493 = vpop.f32.mrf.mxu0
      %v494 = vadd.f32 0.0, %v493
      %495 = vmatmul.bf16.gmra.mxu0 %v391
      %v496 = vpop.f32.mrf.mxu0
      %v497 = vadd.f32 0.0, %v496
      %v498 = vpop.f32.mrf.mxu0
      %v499 = vadd.f32 0.0, %v498
      %500 = vmatmul.bf16.gmra.mxu0 %v392
      %v501 = vpop.f32.mrf.mxu0
      %v502 = vadd.f32 0.0, %v501
      %v503 = vpop.f32.mrf.mxu0
      %v504 = vadd.f32 0.0, %v503
      %505 = vmatmul.bf16.gmra.mxu0 %v393
      %v506 = vpop.f32.mrf.mxu0
      %v507 = vadd.f32 0.0, %v506
      %v508 = vpop.f32.mrf.mxu0
      %v509 = vadd.f32 0.0, %v508
      %510 = vmatmul.bf16.gmra.mxu0 %v394
      %v511 = vpop.f32.mrf.mxu0
      %v512 = vadd.f32 0.0, %v511
      %v513 = vpop.f32.mrf.mxu0
      %v514 = vadd.f32 0.0, %v513
      %515 = vmatmul.bf16.gmra.mxu0 %v395
      %v516 = vpop.f32.mrf.mxu0
      %v517 = vadd.f32 0.0, %v516
      %v518 = vpop.f32.mrf.mxu0
      %v519 = vadd.f32 0.0, %v518
      %520 = vmatmul.bf16.gmra.mxu0 %v396
      %v521 = vpop.f32.mrf.mxu0
      %v522 = vadd.f32 0.0, %v521
      %v523 = vpop.f32.mrf.mxu0
      %v524 = vadd.f32 0.0, %v523
      %525 = vmatmul.bf16.gmra.mxu0 %v397
      %v526 = vpop.f32.mrf.mxu0
      %v527 = vadd.f32 0.0, %v526
      %v528 = vpop.f32.mrf.mxu0
      %v529 = vadd.f32 0.0, %v528
      %530 = vmatmul.bf16.gmra.mxu0 %v398
      %v531 = vpop.f32.mrf.mxu0
      %v532 = vadd.f32 0.0, %v531
      %v533 = vpop.f32.mrf.mxu0
      %v534 = vadd.f32 0.0, %v533
      %535 = vmatmul.bf16.gmra.mxu0 %v399
      %v536 = vpop.f32.mrf.mxu0
      %v537 = vadd.f32 0.0, %v536
      %v538 = vpop.f32.mrf.mxu0
      %v539 = vadd.f32 0.0, %v538
      %540 = vmatmul.bf16.gmra.mxu0 %v400
      %v541 = vpop.f32.mrf.mxu0
      %v542 = vadd.f32 0.0, %v541
      %v543 = vpop.f32.mrf.mxu0
      %v544 = vadd.f32 0.0, %v543
      %545 = vmatmul.bf16.gmra.mxu0 %v401
      %v546 = vpop.f32.mrf.mxu0
      %v547 = vadd.f32 0.0, %v546
      %v548 = vpop.f32.mrf.mxu0
      %v549 = vadd.f32 0.0, %v548
      %550 = vmatmul.bf16.gmra.mxu0 %v402
      %v551 = vpop.f32.mrf.mxu0
      %v552 = vadd.f32 0.0, %v551
      %v553 = vpop.f32.mrf.mxu0
      %v554 = vadd.f32 0.0, %v553
      %555 = vdwg.mxu0
      %v556 = vpack.c.bf16 %v477, %v477
      %v557 = vpack.c.bf16 %v479, %v479
      %v558 = vpack.c.bf16 %v482, %v482
      %v559 = vpack.c.bf16 %v484, %v484
      %v560 = vpack.c.bf16 %v487, %v487
      %v561 = vpack.c.bf16 %v489, %v489
      %v562 = vpack.c.bf16 %v492, %v492
      %v563 = vpack.c.bf16 %v494, %v494
      %v564 = vpack.c.bf16 %v497, %v497
      %v565 = vpack.c.bf16 %v499, %v499
      %v566 = vpack.c.bf16 %v502, %v502
      %v567 = vpack.c.bf16 %v504, %v504
      %v568 = vpack.c.bf16 %v507, %v507
      %v569 = vpack.c.bf16 %v509, %v509
      %v570 = vpack.c.bf16 %v512, %v512
      %v571 = vpack.c.bf16 %v514, %v514
      %v572 = vpack.c.bf16 %v517, %v517
      %v573 = vpack.c.bf16 %v519, %v519
      %v574 = vpack.c.bf16 %v522, %v522
      %v575 = vpack.c.bf16 %v524, %v524
      %v576 = vpack.c.bf16 %v527, %v527
      %v577 = vpack.c.bf16 %v529, %v529
      %v578 = vpack.c.bf16 %v532, %v532
      %v579 = vpack.c.bf16 %v534, %v534
      %v580 = vpack.c.bf16 %v537, %v537
      %v581 = vpack.c.bf16 %v539, %v539
      %v582 = vpack.c.bf16 %v542, %v542
      %v583 = vpack.c.bf16 %v544, %v544
      %v584 = vpack.c.bf16 %v547, %v547
      %v585 = vpack.c.bf16 %v549, %v549
      %v586 = vpack.c.bf16 %v552, %v552
      %v587 = vpack.c.bf16 %v554, %v554
      %588 = vst [vmem:[%s259] sm:$0xf] %v556
      %589 = vst [vmem:[%s259 + $0x4] sm:$0xf] %v557
      %590 = vst [vmem:[%s259 + $0x8] sm:$0xf] %v558
      %591 = vst [vmem:[%s259 + $0xc] sm:$0xf] %v559
      %592 = vst [vmem:[%s259 + $0x10] sm:$0xf] %v560
      %593 = vst [vmem:[%s259 + $0x14] sm:$0xf] %v561
      %594 = vst [vmem:[%s259 + $0x18] sm:$0xf] %v562
      %595 = vst [vmem:[%s259 + $0x1c] sm:$0xf] %v563
      %596 = vst [vmem:[%s259 + $0x20] sm:$0xf] %v564
      %597 = vst [vmem:[%s259 + $0x24] sm:$0xf] %v565
      %598 = vst [vmem:[%s259 + $0x28] sm:$0xf] %v566
      %599 = vst [vmem:[%s259 + $0x2c] sm:$0xf] %v567
      %600 = vst [vmem:[%s259 + $0x30] sm:$0xf] %v568
      %601 = vst [vmem:[%s259 + $0x34] sm:$0xf] %v569
      %602 = vst [vmem:[%s259 + $0x38] sm:$0xf] %v570
      %603 = vst [vmem:[%s259 + $0x3c] sm:$0xf] %v571
      %604 = vst [vmem:[%s259 + $0x40] sm:$0xf] %v572
      %605 = vst [vmem:[%s259 + $0x44] sm:$0xf] %v573
      %606 = vst [vmem:[%s259 + $0x48] sm:$0xf] %v574
      %607 = vst [vmem:[%s259 + $0x4c] sm:$0xf] %v575
      %608 = vst [vmem:[%s259 + $0x50] sm:$0xf] %v576
      %609 = vst [vmem:[%s259 + $0x54] sm:$0xf] %v577
      %610 = vst [vmem:[%s259 + $0x58] sm:$0xf] %v578
      %611 = vst [vmem:[%s259 + $0x5c] sm:$0xf] %v579
      %612 = vst [vmem:[%s259 + $0x60] sm:$0xf] %v580
      %613 = vst [vmem:[%s259 + $0x64] sm:$0xf] %v581
      %614 = vst [vmem:[%s259 + $0x68] sm:$0xf] %v582
      %615 = vst [vmem:[%s259 + $0x6c] sm:$0xf] %v583
      %616 = vst [vmem:[%s259 + $0x70] sm:$0xf] %v584
      %617 = vst [vmem:[%s259 + $0x74] sm:$0xf] %v585
      %618 = vst [vmem:[%s259 + $0x78] sm:$0xf] %v586
      %619 = vst [vmem:[%s259 + $0x7c] sm:$0xf] %v587
      %v620 = vadd.f32 %v477, %v479
      %v621 = vadd.f32 %v620, %v482
      %v622 = vadd.f32 %v621, %v484
      %v623 = vadd.f32 %v622, %v487
      %v624 = vadd.f32 %v623, %v489
      %v625 = vadd.f32 %v624, %v492
      %v626 = vadd.f32 %v625, %v494
      %v627 = vadd.f32 %v626, %v497
      %v628 = vadd.f32 %v627, %v499
      %v629 = vadd.f32 %v628, %v502
      %v630 = vadd.f32 %v629, %v504
      %v631 = vadd.f32 %v630, %v507
      %v632 = vadd.f32 %v631, %v509
      %v633 = vadd.f32 %v632, %v512
      %v634 = vadd.f32 %v633, %v514
      %v635 = vadd.f32 %v634, %v517
      %v636 = vadd.f32 %v635, %v519
      %v637 = vadd.f32 %v636, %v522
      %v638 = vadd.f32 %v637, %v524
      %v639 = vadd.f32 %v638, %v527
      %v640 = vadd.f32 %v639, %v529
      %v641 = vadd.f32 %v640, %v532
      %v642 = vadd.f32 %v641, %v534
      %v643 = vadd.f32 %v642, %v537
      %v644 = vadd.f32 %v643, %v539
      %v645 = vadd.f32 %v644, %v542
      %v646 = vadd.f32 %v645, %v544
      %v647 = vadd.f32 %v646, %v547
      %v648 = vadd.f32 %v647, %v549
      %v649 = vadd.f32 %v648, %v552
      %v650 = vadd.f32 %v649, %v554
      %651 = vst [vmem:[%s267] sm:$0xff] %v650
      %v652 = vmul.f32 %v477, %v477
      %v653 = vmul.f32 %v479, %v479
      %v654 = vmul.f32 %v482, %v482
      %v655 = vmul.f32 %v484, %v484
      %v656 = vmul.f32 %v487, %v487
      %v657 = vmul.f32 %v489, %v489
      %v658 = vmul.f32 %v492, %v492
      %v659 = vmul.f32 %v494, %v494
      %v660 = vmul.f32 %v497, %v497
      %v661 = vmul.f32 %v499, %v499
      %v662 = vmul.f32 %v502, %v502
      %v663 = vmul.f32 %v504, %v504
      %v664 = vmul.f32 %v507, %v507
      %v665 = vmul.f32 %v509, %v509
      %v666 = vmul.f32 %v512, %v512
      %v667 = vmul.f32 %v514, %v514
      %v668 = vmul.f32 %v517, %v517
      %v669 = vmul.f32 %v519, %v519
      %v670 = vmul.f32 %v522, %v522
      %v671 = vmul.f32 %v524, %v524
      %v672 = vmul.f32 %v527, %v527
      %v673 = vmul.f32 %v529, %v529
      %v674 = vmul.f32 %v532, %v532
      %v675 = vmul.f32 %v534, %v534
      %v676 = vmul.f32 %v537, %v537
      %v677 = vmul.f32 %v539, %v539
      %v678 = vmul.f32 %v542, %v542
      %v679 = vmul.f32 %v544, %v544
      %v680 = vmul.f32 %v547, %v547
      %v681 = vmul.f32 %v549, %v549
      %v682 = vmul.f32 %v552, %v552
      %v683 = vmul.f32 %v554, %v554
      %v684 = vadd.f32 %v652, %v653
      %v685 = vadd.f32 %v684, %v654
      %v686 = vadd.f32 %v685, %v655
      %v687 = vadd.f32 %v686, %v656
      %v688 = vadd.f32 %v687, %v657
      %v689 = vadd.f32 %v688, %v658
      %v690 = vadd.f32 %v689, %v659
      %v691 = vadd.f32 %v690, %v660
      %v692 = vadd.f32 %v691, %v661
      %v693 = vadd.f32 %v692, %v662
      %v694 = vadd.f32 %v693, %v663
      %v695 = vadd.f32 %v694, %v664
      %v696 = vadd.f32 %v695, %v665
      %v697 = vadd.f32 %v696, %v666
      %v698 = vadd.f32 %v697, %v667
      %v699 = vadd.f32 %v698, %v668
      %v700 = vadd.f32 %v699, %v669
      %v701 = vadd.f32 %v700, %v670
      %v702 = vadd.f32 %v701, %v671
      %v703 = vadd.f32 %v702, %v672
      %v704 = vadd.f32 %v703, %v673
      %v705 = vadd.f32 %v704, %v674
      %v706 = vadd.f32 %v705, %v675
      %v707 = vadd.f32 %v706, %v676
      %v708 = vadd.f32 %v707, %v677
      %v709 = vadd.f32 %v708, %v678
      %v710 = vadd.f32 %v709, %v679
      %v711 = vadd.f32 %v710, %v680
      %v712 = vadd.f32 %v711, %v681
      %v713 = vadd.f32 %v712, %v682
      %v714 = vadd.f32 %v713, %v683
      %715 = vst [vmem:[%s274] sm:$0xff] %v714
      %s716 = smul.u32 32, %s20
      %p717 = scmp.lt.s32.totalorder %s716, 63
      %s718 = scalar_select %p717, %s716, 63
      %p719 = scmp.lt.s32.totalorder %s21, 0
      %s720 = scalar_select %p719, %s21, 0
      %s721 = sadd.s32 %s720, %s718
      %s722 = smul.addr %s721, 4
      %s723 = scalar_lea.vmem %s2, %s722
      %p724 = scmp.lt.s32.totalorder %s20, 1
      %s725 = scalar_select %p724, %s20, 1
      %p726 = scmp.lt.s32.totalorder %s21, 0
      %s727 = scalar_select %p726, %s21, 0
      %s728 = sadd.s32 %s727, %s725
      %s729 = smul.addr %s728, 8
      %s730 = scalar_lea.vmem %s3, %s729
      %p731 = scmp.lt.s32.totalorder %s20, 1
      %s732 = scalar_select %p731, %s20, 1
      %p733 = scmp.lt.s32.totalorder %s21, 0
      %s734 = scalar_select %p733, %s21, 0
      %s735 = sadd.s32 %s734, %s732
      %s736 = smul.addr %s735, 8
      %s737 = scalar_lea.vmem %s4, %s736
      // Predicated region
      $region29: #{transition_up_forward.2} parent=27 // pred_check
        %p738 = pneg %p100
      $region30: #{transition_up_forward.2} parent=27 // pred_check_branch
        %740 = sbr.rel (%p738) target = $region32
      $region31: #{transition_up_forward.2} parent=27 // pred_region
        %s741 = smul.u32 32, %s20
      $region32: #{transition_up_forward.2} parent=27 // pred_fallthru
        _
      // Predicated region
      $region33: #{transition_up_forward.2} parent=27 // pred_check
        %p742 = pneg %p128
      $region34: #{transition_up_forward.2} parent=27 // pred_check_branch
        %744 = sbr.rel (%p742) target = $region36
      $region35: #{transition_up_forward.2} parent=27 // pred_region
        _
      $region36: #{transition_up_forward.2} parent=27 // pred_fallthru
        _
      // Predicated region
      $region37: #{transition_up_forward.2} parent=27 // pred_check
        %p745 = pneg %p156
      $region38: #{transition_up_forward.2} parent=27 // pred_check_branch
        %747 = sbr.rel (%p745) target = $region40
      $region39: #{transition_up_forward.2} parent=27 // pred_region
        _
      $region40: #{transition_up_forward.2} parent=27 // pred_fallthru
        _
    $region28: #{transition_up_forward.2} parent=5 // pred_fallthru
      _
    %p748 = scmp.le.s32.totalorder 2, %s11
    // Predicated region
    $region41: #{transition_up_forward.2} parent=5 // pred_check
      %p749 = pneg %p748
    $region42: #{transition_up_forward.2} parent=5 // pred_check_branch
      %751 = sbr.rel (%p749) target = $region44
    $region43: #{transition_up_forward.2} parent=5 // pred_region
      %s752 = ssub.s32 %s11, 2
      // Predicated region
      $region45: #{transition_up_forward.2} parent=43 // pred_check
        %p753 = pneg %p106
      $region46: #{transition_up_forward.2} parent=43 // pred_check_branch
        %755 = sbr.rel (%p753) target = $region48
      $region47: #{transition_up_forward.2} parent=43 // pred_region
        %s756 = smul.u32 32, %s22
        %p757 = scmp.lt.s32.totalorder %s756, 63
        %s758 = scalar_select %p757, %s756, 63
        %p759 = scmp.lt.s32.totalorder %s23, 0
        %s760 = scalar_select %p759, %s23, 0
        %s761 = sadd.s32 %s760, %s758
        %s762 = smul.addr %s761, 4
        %s763 = scalar_lea.vmem %s2, %s762
      $region48: #{transition_up_forward.2} parent=43 // pred_fallthru
        _
      // Predicated region
      $region49: #{transition_up_forward.2} parent=43 // pred_check
        %p764 = pneg %p134
      $region50: #{transition_up_forward.2} parent=43 // pred_check_branch
        %766 = sbr.rel (%p764) target = $region52
      $region51: #{transition_up_forward.2} parent=43 // pred_region
        %p767 = scmp.lt.s32.totalorder %s22, 1
        %s768 = scalar_select %p767, %s22, 1
        %p769 = scmp.lt.s32.totalorder %s23, 0
        %s770 = scalar_select %p769, %s23, 0
        %s771 = sadd.s32 %s770, %s768
        %s772 = smul.addr %s771, 8
        %s773 = scalar_lea.vmem %s3, %s772
      $region52: #{transition_up_forward.2} parent=43 // pred_fallthru
        _
      // Predicated region
      $region53: #{transition_up_forward.2} parent=43 // pred_check
        %p774 = pneg %p162
      $region54: #{transition_up_forward.2} parent=43 // pred_check_branch
        %776 = sbr.rel (%p774) target = $region56
      $region55: #{transition_up_forward.2} parent=43 // pred_region
        %p777 = scmp.lt.s32.totalorder %s22, 1
        %s778 = scalar_select %p777, %s22, 1
        %p779 = scmp.lt.s32.totalorder %s23, 0
        %s780 = scalar_select %p779, %s23, 0
        %s781 = sadd.s32 %s780, %s778
        %s782 = smul.addr %s781, 8
        %s783 = scalar_lea.vmem %s4, %s782
      $region56: #{transition_up_forward.2} parent=43 // pred_fallthru
        _
    $region44: #{transition_up_forward.2} parent=5 // pred_fallthru
      _
  $region6: #{transition_up_forward.2} parent=0 // loop_footer
    %s15 = sadd.s32 1, %s11
  $region7: #{transition_up_forward.2} parent=0 // loop_footer_branch
    %10 = sbr.rel target = $region3
  $region8: #{transition_up_forward.2} parent=0 // loop_exit
    _

// kernel: transition_up_forward.3
$region0: #{transition_up_forward.3}
  #allocation0 [shape = 'u32[]', space=smem, size = 0x4, offset = 0x4, fixed_abs, tag = 'smem constant byte address 0x4 - core index']
  #allocation1 [shape = 'u32[72,128]{1,0:T(1,128)}', space=vmem, size = 0x9000, scoped, tag = 'internal scratch']
  %s0 = inlined_call_operand.vmem [shape: bf16[512,128], index: 0, kind: input, shape index: {}]
  %s1 = inlined_call_operand.vmem [shape: f32[1,128], index: 1, kind: input, shape index: {}]
  %s2 = inlined_call_operand.vmem [shape: f32[1,128], index: 2, kind: input, shape index: {}]
  %s3 = inlined_call_operand.vmem [shape: f32[512,128], index: 3, kind: input, shape index: {}]
  %s4 = inlined_call_operand.vmem [shape: bf16[128,128], index: 4, kind: input, shape index: {}]
  %s5 = inlined_call_operand.vmem [shape: bf16[128,128], index: 5, kind: input, shape index: {}]
  %s6 = inlined_call_operand.hbm [shape: f32[512,128], index: 6, kind: output, shape index: {}]
  %s7 = sld [smem:[#allocation0]]
  $region57: #{transition_up_forward.3} parent=0
    _
  %s9 = ssub.s32 1, %s7
  %s10 = scalar_select 0, %s9, %s7
  $region1: #{transition_up_forward.3} parent=0
    #allocation2 [shape = 'u8[262144]{0}', space=vmem, size = 0x40000, scoped, tag = 'output window, operand 0']
    #allocation3 [shape = 's32[2]{0}', space=sflag, size = 0x8, scoped, tag = 'scoped memory for transition_up_forward.3']
    %11 = vsyncpa [#allocation3], 0
    %s12 = scalar_lea.sflag [#allocation3], 1
    %13 = vsyncpa %s12, 0
    loop: start=0, step=1, limit=4
    $region2: #{transition_up_forward.3} parent=1 // loop_pre_header
      _
    $region3: #{transition_up_forward.3} parent=1 // loop_header
      %s15 = sphi 0, %s19
      %p16 = scmp.ge.s32.totalorder %s15, 4
      %s22 = sphi 0, %s34
      %s23 = sphi 0, %s30
      %s24 = sphi 0, %s22
      %s25 = sphi 0, %s23
      %s26 = sphi 0, %s24
      %s27 = sphi 0, %s25
      %s37 = sphi 0, %s39
      %s40 = sphi 0, %s37
      %s41 = sphi 0, %s40
      %s57 = sphi 0, %s41
      %s61 = sphi 0, %s61
      %s63 = sphi 0, %s61
      %s64 = sphi 0, %s63
      %s78 = sphi 0, %s64
      %s82 = sphi 0, %s82
      %s84 = sphi 0, %s82
      %s85 = sphi 0, %s84
      %s99 = sphi 0, %s85
      %s105 = sphi 0, %s107
      %s108 = sphi 0, %s105
      %s109 = sphi 0, %s108
      %s125 = sphi 0, %s109
      %s131 = sphi 0, %s133
      %s134 = sphi 0, %s131
      %s135 = sphi 0, %s134
      %s151 = sphi 0, %s135
      %s157 = sphi 0, %s159
      %s160 = sphi 0, %s157
      %s161 = sphi 0, %s160
      %s177 = sphi 0, %s161
      %s185 = sphi 0, %s187
      %s188 = sphi 0, %s185
      %s189 = sphi 0, %s188
      %s205 = sphi 0, %s189
    $region4: #{transition_up_forward.3} parent=1 // loop_header_branch
      %18 = sbr.rel (%p16) target = $region8
    $region5: #{transition_up_forward.3} parent=1 // loop_body
      %s20 = ssub.s32 %s15, 1
      %s21 = ssub.s32 %s15, 2
      %s28 = sadd.s32 1, %s23
      %p29 = scmp.ge.s32.totalorder %s28, 1
      %s30 = scalar_select %p29, 0, %s28
      %s31 = sadd.s32 1, %s22
      %s32 = scalar_select %p29, %s31, %s22
      %p33 = scmp.ge.s32.totalorder %s32, 2
      %s34 = scalar_select %p33, 0, %s32
      %s35 = ssub.s32 %s22, %s34
      %p36 = scmp.eq.s32.totalorder %s35, 0
      %s38 = sadd.s32 %s37, 1
      %s39 = scalar_select %p36, %s37, %s38
      %p42 = pneg %p36
      %p43 = scmp.eq.s32.totalorder %s15, 1
      %p44 = por %p42, %p43
      %p45 = scmp.ne.s32.totalorder %s37, %s40
      %p46 = scmp.eq.s32.totalorder %s15, 0
      %p47 = por %p45, %p46
      %p48 = scmp.ne.s32.totalorder %s37, %s40
      %p49 = scmp.eq.s32.totalorder %s20, 1
      %p50 = por %p48, %p49
      %p51 = scmp.ne.s32.totalorder %s40, %s41
      %p52 = scmp.eq.s32.totalorder %s20, 0
      %p53 = por %p51, %p52
      %p54 = scmp.ne.s32.totalorder %s40, %s41
      %p55 = scmp.eq.s32.totalorder %s21, 1
      %p56 = por %p54, %p55
      %p58 = scmp.ne.s32.totalorder %s41, %s57
      %p59 = scmp.eq.s32.totalorder %s21, 0
      %p60 = por %p58, %p59
      %s62 = sadd.s32 %s61, 1
      %p65 = scmp.eq.s32.totalorder %s15, 1
      %p66 = scmp.ne.s32.totalorder %s61, %s63
      %p67 = scmp.eq.s32.totalorder %s15, 0
      %p68 = por %p66, %p67
      %p69 = scmp.ne.s32.totalorder %s61, %s63
      %p70 = scmp.eq.s32.totalorder %s20, 1
      %p71 = por %p69, %p70
      %p72 = scmp.ne.s32.totalorder %s63, %s64
      %p73 = scmp.eq.s32.totalorder %s20, 0
      %p74 = por %p72, %p73
      %p75 = scmp.ne.s32.totalorder %s63, %s64
      %p76 = scmp.eq.s32.totalorder %s21, 1
      %p77 = por %p75, %p76
      %p79 = scmp.ne.s32.totalorder %s64, %s78
      %p80 = scmp.eq.s32.totalorder %s21, 0
      %p81 = por %p79, %p80
      %s83 = sadd.s32 %s82, 1
      %p86 = scmp.eq.s32.totalorder %s15, 1
      %p87 = scmp.ne.s32.totalorder %s82, %s84
      %p88 = scmp.eq.s32.totalorder %s15, 0
      %p89 = por %p87, %p88
      %p90 = scmp.ne.s32.totalorder %s82, %s84
      %p91 = scmp.eq.s32.totalorder %s20, 1
      %p92 = por %p90, %p91
      %p93 = scmp.ne.s32.totalorder %s84, %s85
      %p94 = scmp.eq.s32.totalorder %s20, 0
      %p95 = por %p93, %p94
      %p96 = scmp.ne.s32.totalorder %s84, %s85
      %p97 = scmp.eq.s32.totalorder %s21, 1
      %p98 = por %p96, %p97
      %p100 = scmp.ne.s32.totalorder %s85, %s99
      %p101 = scmp.eq.s32.totalorder %s21, 0
      %p102 = por %p100, %p101
      %s103 = ssub.s32 %s22, %s34
      %p104 = scmp.eq.s32.totalorder %s103, 0
      %s106 = sadd.s32 %s105, 1
      %s107 = scalar_select %p104, %s105, %s106
      %p110 = pneg %p104
      %p111 = scmp.eq.s32.totalorder %s15, 1
      %p112 = por %p110, %p111
      %p113 = scmp.ne.s32.totalorder %s105, %s108
      %p114 = scmp.eq.s32.totalorder %s15, 0
      %p115 = por %p113, %p114
      %p116 = scmp.ne.s32.totalorder %s105, %s108
      %p117 = scmp.eq.s32.totalorder %s20, 1
      %p118 = por %p116, %p117
      %p119 = scmp.ne.s32.totalorder %s108, %s109
      %p120 = scmp.eq.s32.totalorder %s20, 0
      %p121 = por %p119, %p120
      %p122 = scmp.ne.s32.totalorder %s108, %s109
      %p123 = scmp.eq.s32.totalorder %s21, 1
      %p124 = por %p122, %p123
      %p126 = scmp.ne.s32.totalorder %s109, %s125
      %p127 = scmp.eq.s32.totalorder %s21, 0
      %p128 = por %p126, %p127
      %s129 = ssub.s32 %s23, %s30
      %p130 = scmp.eq.s32.totalorder %s129, 0
      %s132 = sadd.s32 %s131, 1
      %s133 = scalar_select %p130, %s131, %s132
      %p136 = pneg %p130
      %p137 = scmp.eq.s32.totalorder %s15, 1
      %p138 = por %p136, %p137
      %p139 = scmp.ne.s32.totalorder %s131, %s134
      %p140 = scmp.eq.s32.totalorder %s15, 0
      %p141 = por %p139, %p140
      %p142 = scmp.ne.s32.totalorder %s131, %s134
      %p143 = scmp.eq.s32.totalorder %s20, 1
      %p144 = por %p142, %p143
      %p145 = scmp.ne.s32.totalorder %s134, %s135
      %p146 = scmp.eq.s32.totalorder %s20, 0
      %p147 = por %p145, %p146
      %p148 = scmp.ne.s32.totalorder %s134, %s135
      %p149 = scmp.eq.s32.totalorder %s21, 1
      %p150 = por %p148, %p149
      %p152 = scmp.ne.s32.totalorder %s135, %s151
      %p153 = scmp.eq.s32.totalorder %s21, 0
      %p154 = por %p152, %p153
      %s155 = ssub.s32 %s23, %s30
      %p156 = scmp.eq.s32.totalorder %s155, 0
      %s158 = sadd.s32 %s157, 1
      %s159 = scalar_select %p156, %s157, %s158
      %p162 = pneg %p156
      %p163 = scmp.eq.s32.totalorder %s15, 1
      %p164 = por %p162, %p163
      %p165 = scmp.ne.s32.totalorder %s157, %s160
      %p166 = scmp.eq.s32.totalorder %s15, 0
      %p167 = por %p165, %p166
      %p168 = scmp.ne.s32.totalorder %s157, %s160
      %p169 = scmp.eq.s32.totalorder %s20, 1
      %p170 = por %p168, %p169
      %p171 = scmp.ne.s32.totalorder %s160, %s161
      %p172 = scmp.eq.s32.totalorder %s20, 0
      %p173 = por %p171, %p172
      %p174 = scmp.ne.s32.totalorder %s160, %s161
      %p175 = scmp.eq.s32.totalorder %s21, 1
      %p176 = por %p174, %p175
      %p178 = scmp.ne.s32.totalorder %s161, %s177
      %p179 = scmp.eq.s32.totalorder %s21, 0
      %p180 = por %p178, %p179
      %s181 = ssub.s32 %s22, %s34
      %s182 = ssub.s32 %s23, %s30
      %s183 = sor.u32 %s181, %s182
      %p184 = scmp.eq.s32.totalorder %s183, 0
      %s186 = sadd.s32 %s185, 1
      %s187 = scalar_select %p184, %s185, %s186
      %p190 = pneg %p184
      %p191 = scmp.eq.s32.totalorder %s15, 1
      %p192 = por %p190, %p191
      %p193 = scmp.ne.s32.totalorder %s185, %s188
      %p194 = scmp.eq.s32.totalorder %s15, 0
      %p195 = por %p193, %p194
      %p196 = scmp.ne.s32.totalorder %s185, %s188
      %p197 = scmp.eq.s32.totalorder %s20, 1
      %p198 = por %p196, %p197
      %p199 = scmp.ne.s32.totalorder %s188, %s189
      %p200 = scmp.eq.s32.totalorder %s20, 0
      %p201 = por %p199, %p200
      %p202 = scmp.ne.s32.totalorder %s188, %s189
      %p203 = scmp.eq.s32.totalorder %s21, 1
      %p204 = por %p202, %p203
      %p206 = scmp.ne.s32.totalorder %s189, %s205
      %p207 = scmp.eq.s32.totalorder %s21, 0
      %p208 = por %p206, %p207
      %p209 = scmp.le.s32.totalorder 1, %s15
      %p210 = scmp.lt.s32.totalorder %s15, 3
      %p211 = pnand %p209, %p210
      %p212 = pneg %p211
      // Predicated region
      $region9: #{transition_up_forward.3} parent=5 // pred_check
        _
      $region10: #{transition_up_forward.3} parent=5 // pred_check_branch
        %214 = sbr.rel (%p211) target = $region12
      $region11: #{transition_up_forward.3} parent=5 // pred_region
        %s215 = ssub.s32 %s15, 1
        // Predicated region
        $region13: #{transition_up_forward.3} parent=11 // pred_check
          %p216 = pneg %p74
        $region14: #{transition_up_forward.3} parent=11 // pred_check_branch
          %218 = sbr.rel (%p216) target = $region16
        $region15: #{transition_up_forward.3} parent=11 // pred_region
          _
        $region16: #{transition_up_forward.3} parent=11 // pred_fallthru
          _
        // Predicated region
        $region17: #{transition_up_forward.3} parent=11 // pred_check
          %p219 = pneg %p95
        $region18: #{transition_up_forward.3} parent=11 // pred_check_branch
          %221 = sbr.rel (%p219) target = $region20
        $region19: #{transition_up_forward.3} parent=11 // pred_region
          _
        $region20: #{transition_up_forward.3} parent=11 // pred_fallthru
          _
        // Predicated region
        $region21: #{transition_up_forward.3} parent=11 // pred_check
          %p222 = pneg %p147
        $region22: #{transition_up_forward.3} parent=11 // pred_check_branch
          %224 = sbr.rel (%p222) target = $region24
        $region23: #{transition_up_forward.3} parent=11 // pred_region
          %p225 = scmp.lt.s32.totalorder %s25, 0
          %s226 = scalar_select %p225, %s25, 0
          %s227 = smul.addr %s226, 4
          %s228 = scalar_lea.vmem %s4, %s227
        $region24: #{transition_up_forward.3} parent=11 // pred_fallthru
          _
        // Predicated region
        $region25: #{transition_up_forward.3} parent=11 // pred_check
          %p229 = pneg %p173
        $region26: #{transition_up_forward.3} parent=11 // pred_check_branch
          %231 = sbr.rel (%p229) target = $region28
        $region27: #{transition_up_forward.3} parent=11 // pred_region
          %p232 = scmp.lt.s32.totalorder %s25, 0
          %s233 = scalar_select %p232, %s25, 0
          %s234 = smul.addr %s233, 4
          %s235 = scalar_lea.vmem %s5, %s234
        $region28: #{transition_up_forward.3} parent=11 // pred_fallthru
          _
      $region12: #{transition_up_forward.3} parent=5 // pred_fallthru
        _
      %p236 = scmp.lt.s32.totalorder %s15, 2
      // Predicated region
      $region29: #{transition_up_forward.3} parent=5 // pred_check
        %p237 = pneg %p236
      $region30: #{transition_up_forward.3} parent=5 // pred_check_branch
        %239 = sbr.rel (%p237) target = $region32
      $region31: #{transition_up_forward.3} parent=5 // pred_region
        // Predicated region
        $region33: #{transition_up_forward.3} parent=31 // pred_check
          %p240 = pneg %p47
        $region34: #{transition_up_forward.3} parent=31 // pred_check_branch
          %242 = sbr.rel (%p240) target = $region36
        $region35: #{transition_up_forward.3} parent=31 // pred_region
          %s243 = smul.u32 32, %s22
          %p244 = scmp.lt.s32.totalorder %s243, 63
          %s245 = scalar_select %p244, %s243, 63
          %s246 = smul.addr %s245, 4
          %s247 = scalar_lea.vmem %s0, %s246
          %s248 = smul.u32 32, %s22
        $region36: #{transition_up_forward.3} parent=31 // pred_fallthru
          _
        // Predicated region
        $region37: #{transition_up_forward.3} parent=31 // pred_check
          %p249 = pneg %p115
        $region38: #{transition_up_forward.3} parent=31 // pred_check_branch
          %251 = sbr.rel (%p249) target = $region40
        $region39: #{transition_up_forward.3} parent=31 // pred_region
          %s252 = smul.u32 32, %s22
          %p253 = scmp.lt.s32.totalorder %s252, 63
          %s254 = scalar_select %p253, %s252, 63
          %s255 = smul.addr %s254, 8
          %s256 = scalar_lea.vmem %s3, %s255
          %s257 = smul.u32 32, %s22
        $region40: #{transition_up_forward.3} parent=31 // pred_fallthru
          _
      $region32: #{transition_up_forward.3} parent=5 // pred_fallthru
        _
      %p258 = scmp.le.s32.totalorder 1, %s15
      %p259 = scmp.lt.s32.totalorder %s15, 3
      %p260 = pnand %p258, %p259
      %p261 = pneg %p260
      // Predicated region
      $region41: #{transition_up_forward.3} parent=5 // pred_check
        _
      $region42: #{transition_up_forward.3} parent=5 // pred_check_branch
        %263 = sbr.rel (%p260) target = $region44
      $region43: #{transition_up_forward.3} parent=5 // pred_region
        %s264 = ssub.s32 %s15, 1
        %s265 = smul.u32 32, %s24
        %p266 = scmp.lt.s32.totalorder %s265, 63
        %s267 = scalar_select %p266, %s265, 63
        %s268 = smul.addr %s267, 4
        %s269 = scalar_lea.vmem %s0, %s268
        %p270 = pneg %p53
        %p271 = pneg %p50
        %p272 = pneg %p74
        %p273 = pneg %p71
        %p274 = pneg %p95
        %p275 = pneg %p92
        %s276 = smul.u32 32, %s24
        %p277 = scmp.lt.s32.totalorder %s276, 63
        %s278 = scalar_select %p277, %s276, 63
        %s279 = smul.addr %s278, 8
        %s280 = scalar_lea.vmem %s3, %s279
        %p281 = pneg %p121
        %p282 = pneg %p118
        %p283 = scmp.lt.s32.totalorder %s25, 0
        %s284 = scalar_select %p283, %s25, 0
        %s285 = smul.addr %s284, 4
        %s286 = scalar_lea.vmem %s4, %s285
        %p287 = pneg %p147
        %p288 = pneg %p144
        %p289 = scmp.lt.s32.totalorder %s25, 0
        %s290 = scalar_select %p289, %s25, 0
        %s291 = smul.addr %s290, 4
        %s292 = scalar_lea.vmem %s5, %s291
        %p293 = pneg %p173
        %p294 = pneg %p170
        %p295 = pneg %p201
        %p296 = pneg %p198
        %s297 = sand.u32 %s188, 1
        %s298 = scalar_lea.sflag [#allocation3], %s297
        %s299 = sand.u32 %s188, 1
        %s300 = smul.addr %s299, 256
        %s301 = scalar_lea.vmem [#allocation2], %s300
        %s302 = smul.u32 32, %s24
        %p303 = scmp.lt.s32.totalorder %s302, 63
        %s304 = scalar_select %p303, %s302, 63
        %s305 = smul.addr %s304, 4
        %s306 = scalar_lea.vmem %s0, %s305
        %s307 = smul.u32 32, %s24
        %s308 = smul.u32 32, %s24
        %p309 = scmp.lt.s32.totalorder %s308, 63
        %s310 = scalar_select %p309, %s308, 63
        %s311 = smul.addr %s310, 8
        %s312 = scalar_lea.vmem %s3, %s311
        %s313 = smul.u32 32, %s24
        %p314 = scmp.lt.s32.totalorder %s25, 0
        %s315 = scalar_select %p314, %s25, 0
        %s316 = smul.addr %s315, 4
        %s317 = scalar_lea.vmem %s4, %s316
        %p318 = scmp.lt.s32.totalorder %s25, 0
        %s319 = scalar_select %p318, %s25, 0
        %s320 = smul.addr %s319, 4
        %s321 = scalar_lea.vmem %s5, %s320
        %s322 = smul.u32 32, %s24
        %v323 = vld [vmem:[%s306] sm:$0xf]
        %v324 = vld [vmem:[%s306 + $0x4] sm:$0xf]
        %v325 = vld [vmem:[%s306 + $0x8] sm:$0xf]
        %v326 = vld [vmem:[%s306 + $0xc] sm:$0xf]
        %v327 = vld [vmem:[%s306 + $0x10] sm:$0xf]
        %v328 = vld [vmem:[%s306 + $0x14] sm:$0xf]
        %v329 = vld [vmem:[%s306 + $0x18] sm:$0xf]
        %v330 = vld [vmem:[%s306 + $0x1c] sm:$0xf]
        %v331 = vld [vmem:[%s306 + $0x20] sm:$0xf]
        %v332 = vld [vmem:[%s306 + $0x24] sm:$0xf]
        %v333 = vld [vmem:[%s306 + $0x28] sm:$0xf]
        %v334 = vld [vmem:[%s306 + $0x2c] sm:$0xf]
        %v335 = vld [vmem:[%s306 + $0x30] sm:$0xf]
        %v336 = vld [vmem:[%s306 + $0x34] sm:$0xf]
        %v337 = vld [vmem:[%s306 + $0x38] sm:$0xf]
        %v338 = vld [vmem:[%s306 + $0x3c] sm:$0xf]
        %v339 = vld [vmem:[%s306 + $0x40] sm:$0xf]
        %v340 = vld [vmem:[%s306 + $0x44] sm:$0xf]
        %v341 = vld [vmem:[%s306 + $0x48] sm:$0xf]
        %v342 = vld [vmem:[%s306 + $0x4c] sm:$0xf]
        %v343 = vld [vmem:[%s306 + $0x50] sm:$0xf]
        %v344 = vld [vmem:[%s306 + $0x54] sm:$0xf]
        %v345 = vld [vmem:[%s306 + $0x58] sm:$0xf]
        %v346 = vld [vmem:[%s306 + $0x5c] sm:$0xf]
        %v347 = vld [vmem:[%s306 + $0x60] sm:$0xf]
        %v348 = vld [vmem:[%s306 + $0x64] sm:$0xf]
        %v349 = vld [vmem:[%s306 + $0x68] sm:$0xf]
        %v350 = vld [vmem:[%s306 + $0x6c] sm:$0xf]
        %v351 = vld [vmem:[%s306 + $0x70] sm:$0xf]
        %v352 = vld [vmem:[%s306 + $0x74] sm:$0xf]
        %v353 = vld [vmem:[%s306 + $0x78] sm:$0xf]
        %v354 = vld [vmem:[%s306 + $0x7c] sm:$0xf]
        %v355 = vunpack.c.l.bf16 %v323
        %v356 = vunpack.c.l.bf16 %v324
        %v357 = vunpack.c.l.bf16 %v325
        %v358 = vunpack.c.l.bf16 %v326
        %v359 = vunpack.c.l.bf16 %v327
        %v360 = vunpack.c.l.bf16 %v328
        %v361 = vunpack.c.l.bf16 %v329
        %v362 = vunpack.c.l.bf16 %v330
        %v363 = vunpack.c.l.bf16 %v331
        %v364 = vunpack.c.l.bf16 %v332
        %v365 = vunpack.c.l.bf16 %v333
        %v366 = vunpack.c.l.bf16 %v334
        %v367 = vunpack.c.l.bf16 %v335
        %v368 = vunpack.c.l.bf16 %v336
        %v369 = vunpack.c.l.bf16 %v337
        %v370 = vunpack.c.l.bf16 %v338
        %v371 = vunpack.c.l.bf16 %v339
        %v372 = vunpack.c.l.bf16 %v340
        %v373 = vunpack.c.l.bf16 %v341
        %v374 = vunpack.c.l.bf16 %v342
        %v375 = vunpack.c.l.bf16 %v343
        %v376 = vunpack.c.l.bf16 %v344
        %v377 = vunpack.c.l.bf16 %v345
        %v378 = vunpack.c.l.bf16 %v346
        %v379 = vunpack.c.l.bf16 %v347
        %v380 = vunpack.c.l.bf16 %v348
        %v381 = vunpack.c.l.bf16 %v349
        %v382 = vunpack.c.l.bf16 %v350
        %v383 = vunpack.c.l.bf16 %v351
        %v384 = vunpack.c.l.bf16 %v352
        %v385 = vunpack.c.l.bf16 %v353
        %v386 = vunpack.c.l.bf16 %v354
        %v387 = vld [vmem:[%s1] sm:$0x1]
        %v389 = vperm.slane %v387, 0
        %v391 = vmul.f32 %v355, %v389
        %v392 = vmul.f32 %v356, %v389
        %v393 = vmul.f32 %v357, %v389
        %v394 = vmul.f32 %v358, %v389
        %v395 = vmul.f32 %v359, %v389
        %v396 = vmul.f32 %v360, %v389
        %v397 = vmul.f32 %v361, %v389
        %v398 = vmul.f32 %v362, %v389
        %v399 = vmul.f32 %v363, %v389
        %v400 = vmul.f32 %v364, %v389
        %v401 = vmul.f32 %v365, %v389
        %v402 = vmul.f32 %v366, %v389
        %v403 = vmul.f32 %v367, %v389
        %v404 = vmul.f32 %v368, %v389
        %v405 = vmul.f32 %v369, %v389
        %v406 = vmul.f32 %v370, %v389
        %v407 = vmul.f32 %v371, %v389
        %v408 = vmul.f32 %v372, %v389
        %v409 = vmul.f32 %v373, %v389
        %v410 = vmul.f32 %v374, %v389
        %v411 = vmul.f32 %v375, %v389
        %v412 = vmul.f32 %v376, %v389
        %v413 = vmul.f32 %v377, %v389
        %v414 = vmul.f32 %v378, %v389
        %v415 = vmul.f32 %v379, %v389
        %v416 = vmul.f32 %v380, %v389
        %v417 = vmul.f32 %v381, %v389
        %v418 = vmul.f32 %v382, %v389
        %v419 = vmul.f32 %v383, %v389
        %v420 = vmul.f32 %v384, %v389
        %v421 = vmul.f32 %v385, %v389
        %v422 = vmul.f32 %v386, %v389
        %v423 = vld [vmem:[%s2] sm:$0x1]
        %v425 = vperm.slane %v423, 0
        %v427 = vadd.f32 %v391, %v425
        %v428 = vadd.f32 %v392, %v425
        %v429 = vadd.f32 %v393, %v425
        %v430 = vadd.f32 %v394, %v425
        %v431 = vadd.f32 %v395, %v425
        %v432 = vadd.f32 %v396, %v425
        %v433 = vadd.f32 %v397, %v425
        %v434 = vadd.f32 %v398, %v425
        %v435 = vadd.f32 %v399, %v425
        %v436 = vadd.f32 %v400, %v425
        %v437 = vadd.f32 %v401, %v425
        %v438 = vadd.f32 %v402, %v425
        %v439 = vadd.f32 %v403, %v425
        %v440 = vadd.f32 %v404, %v425
        %v441 = vadd.f32 %v405, %v425
        %v442 = vadd.f32 %v406, %v425
        %v443 = vadd.f32 %v407, %v425
        %v444 = vadd.f32 %v408, %v425
        %v445 = vadd.f32 %v409, %v425
        %v446 = vadd.f32 %v410, %v425
        %v447 = vadd.f32 %v411, %v425
        %v448 = vadd.f32 %v412, %v425
        %v449 = vadd.f32 %v413, %v425
        %v450 = vadd.f32 %v414, %v425
        %v451 = vadd.f32 %v415, %v425
        %v452 = vadd.f32 %v416, %v425
        %v453 = vadd.f32 %v417, %v425
        %v454 = vadd.f32 %v418, %v425
        %v455 = vadd.f32 %v419, %v425
        %v456 = vadd.f32 %v420, %v425
        %v457 = vadd.f32 %v421, %v425
        %v458 = vadd.f32 %v422, %v425
        %v459 = vmax.f32 %v427, 0.0
        %v460 = vmax.f32 %v428, 0.0
        %v461 = vmax.f32 %v429, 0.0
        %v462 = vmax.f32 %v430, 0.0
        %v463 = vmax.f32 %v431, 0.0
        %v464 = vmax.f32 %v432, 0.0
        %v465 = vmax.f32 %v433, 0.0
        %v466 = vmax.f32 %v434, 0.0
        %v467 = vmax.f32 %v435, 0.0
        %v468 = vmax.f32 %v436, 0.0
        %v469 = vmax.f32 %v437, 0.0
        %v470 = vmax.f32 %v438, 0.0
        %v471 = vmax.f32 %v439, 0.0
        %v472 = vmax.f32 %v440, 0.0
        %v473 = vmax.f32 %v441, 0.0
        %v474 = vmax.f32 %v442, 0.0
        %v475 = vmax.f32 %v443, 0.0
        %v476 = vmax.f32 %v444, 0.0
        %v477 = vmax.f32 %v445, 0.0
        %v478 = vmax.f32 %v446, 0.0
        %v479 = vmax.f32 %v447, 0.0
        %v480 = vmax.f32 %v448, 0.0
        %v481 = vmax.f32 %v449, 0.0
        %v482 = vmax.f32 %v450, 0.0
        %v483 = vmax.f32 %v451, 0.0
        %v484 = vmax.f32 %v452, 0.0
        %v485 = vmax.f32 %v453, 0.0
        %v486 = vmax.f32 %v454, 0.0
        %v487 = vmax.f32 %v455, 0.0
        %v488 = vmax.f32 %v456, 0.0
        %v489 = vmax.f32 %v457, 0.0
        %v490 = vmax.f32 %v458, 0.0
        %v491 = vpack.c.bf16 %v460, %v459
        %v492 = vpack.c.bf16 %v462, %v461
        %v493 = vpack.c.bf16 %v464, %v463
        %v494 = vpack.c.bf16 %v466, %v465
        %v495 = vpack.c.bf16 %v468, %v467
        %v496 = vpack.c.bf16 %v470, %v469
        %v497 = vpack.c.bf16 %v472, %v471
        %v498 = vpack.c.bf16 %v474, %v473
        %v499 = vpack.c.bf16 %v476, %v475
        %v500 = vpack.c.bf16 %v478, %v477
        %v501 = vpack.c.bf16 %v480, %v479
        %v502 = vpack.c.bf16 %v482, %v481
        %v503 = vpack.c.bf16 %v484, %v483
        %v504 = vpack.c.bf16 %v486, %v485
        %v505 = vpack.c.bf16 %v488, %v487
        %v506 = vpack.c.bf16 %v490, %v489
        %v507 = vld [vmem:[%s317] sm:$0xf]
        %v508 = vld [vmem:[%s317 + $0x4] sm:$0xf]
        %v509 = vld [vmem:[%s317 + $0x8] sm:$0xf]
        %v510 = vld [vmem:[%s317 + $0xc] sm:$0xf]
        %v511 = vld [vmem:[%s317 + $0x10] sm:$0xf]
        %v512 = vld [vmem:[%s317 + $0x14] sm:$0xf]
        %v513 = vld [vmem:[%s317 + $0x18] sm:$0xf]
        %v514 = vld [vmem:[%s317 + $0x1c] sm:$0xf]
        %v515 = vld [vmem:[%s317 + $0x20] sm:$0xf]
        %v516 = vld [vmem:[%s317 + $0x24] sm:$0xf]
        %v517 = vld [vmem:[%s317 + $0x28] sm:$0xf]
        %v518 = vld [vmem:[%s317 + $0x2c] sm:$0xf]
        %v519 = vld [vmem:[%s317 + $0x30] sm:$0xf]
        %v520 = vld [vmem:[%s317 + $0x34] sm:$0xf]
        %v521 = vld [vmem:[%s317 + $0x38] sm:$0xf]
        %v522 = vld [vmem:[%s317 + $0x3c] sm:$0xf]
        %v523 = vld [vmem:[%s312] sm:$0xff]
        %v524 = vld [vmem:[%s312 + $0x8] sm:$0xff]
        %v525 = vld [vmem:[%s312 + $0x10] sm:$0xff]
        %v526 = vld [vmem:[%s312 + $0x18] sm:$0xff]
        %v527 = vld [vmem:[%s312 + $0x20] sm:$0xff]
        %v528 = vld [vmem:[%s312 + $0x28] sm:$0xff]
        %v529 = vld [vmem:[%s312 + $0x30] sm:$0xff]
        %v530 = vld [vmem:[%s312 + $0x38] sm:$0xff]
        %v531 = vld [vmem:[%s312 + $0x40] sm:$0xff]
        %v532 = vld [vmem:[%s312 + $0x48] sm:$0xff]
        %v533 = vld [vmem:[%s312 + $0x50] sm:$0xff]
        %v534 = vld [vmem:[%s312 + $0x58] sm:$0xff]
        %v535 = vld [vmem:[%s312 + $0x60] sm:$0xff]
        %v536 = vld [vmem:[%s312 + $0x68] sm:$0xff]
        %v537 = vld [vmem:[%s312 + $0x70] sm:$0xff]
        %v538 = vld [vmem:[%s312 + $0x78] sm:$0xff]
        %v539 = vld [vmem:[%s312 + $0x80] sm:$0xff]
        %v540 = vld [vmem:[%s312 + $0x88] sm:$0xff]
        %v541 = vld [vmem:[%s312 + $0x90] sm:$0xff]
        %v542 = vld [vmem:[%s312 + $0x98] sm:$0xff]
        %v543 = vld [vmem:[%s312 + $0xa0] sm:$0xff]
        %v544 = vld [vmem:[%s312 + $0xa8] sm:$0xff]
        %v545 = vld [vmem:[%s312 + $0xb0] sm:$0xff]
        %v546 = vld [vmem:[%s312 + $0xb8] sm:$0xff]
        %v547 = vld [vmem:[%s312 + $0xc0] sm:$0xff]
        %v548 = vld [vmem:[%s312 + $0xc8] sm:$0xff]
        %v549 = vld [vmem:[%s312 + $0xd0] sm:$0xff]
        %v550 = vld [vmem:[%s312 + $0xd8] sm:$0xff]
        %v551 = vld [vmem:[%s312 + $0xe0] sm:$0xff]
        %v552 = vld [vmem:[%s312 + $0xe8] sm:$0xff]
        %v553 = vld [vmem:[%s312 + $0xf0] sm:$0xff]
        %v554 = vld [vmem:[%s312 + $0xf8] sm:$0xff]
        %v555 = vpack.c.bf16 %v524, %v523
        %v556 = vpack.c.bf16 %v526, %v525
        %v557 = vpack.c.bf16 %v528, %v527
        %v558 = vpack.c.bf16 %v530, %v529
        %v559 = vpack.c.bf16 %v532, %v531
        %v560 = vpack.c.bf16 %v534, %v533
        %v561 = vpack.c.bf16 %v536, %v535
        %v562 = vpack.c.bf16 %v538, %v537
        %v563 = vpack.c.bf16 %v540, %v539
        %v564 = vpack.c.bf16 %v542, %v541
        %v565 = vpack.c.bf16 %v544, %v543
        %v566 = vpack.c.bf16 %v546, %v545
        %v567 = vpack.c.bf16 %v548, %v547
        %v568 = vpack.c.bf16 %v550, %v549
        %v569 = vpack.c.bf16 %v552, %v551
        %v570 = vpack.c.bf16 %v554, %v553
        %v571 = vld [vmem:[%s321] sm:$0xf]
        %v572 = vld [vmem:[%s321 + $0x4] sm:$0xf]
        %v573 = vld [vmem:[%s321 + $0x8] sm:$0xf]
        %v574 = vld [vmem:[%s321 + $0xc] sm:$0xf]
        %v575 = vld [vmem:[%s321 + $0x10] sm:$0xf]
        %v576 = vld [vmem:[%s321 + $0x14] sm:$0xf]
        %v577 = vld [vmem:[%s321 + $0x18] sm:$0xf]
        %v578 = vld [vmem:[%s321 + $0x1c] sm:$0xf]
        %v579 = vld [vmem:[%s321 + $0x20] sm:$0xf]
        %v580 = vld [vmem:[%s321 + $0x24] sm:$0xf]
        %v581 = vld [vmem:[%s321 + $0x28] sm:$0xf]
        %v582 = vld [vmem:[%s321 + $0x2c] sm:$0xf]
        %v583 = vld [vmem:[%s321 + $0x30] sm:$0xf]
        %v584 = vld [vmem:[%s321 + $0x34] sm:$0xf]
        %v585 = vld [vmem:[%s321 + $0x38] sm:$0xf]
        %v586 = vld [vmem:[%s321 + $0x3c] sm:$0xf]
        %v603 = vunpack.c.l.b16 %v571
        %v604 = vunpack.c.l.b16 %v572
        %v605 = vunpack.c.l.b16 %v573
        %v606 = vunpack.c.l.b16 %v574
        %v607 = vunpack.c.l.b16 %v575
        %v608 = vunpack.c.l.b16 %v576
        %v609 = vunpack.c.l.b16 %v577
        %v610 = vunpack.c.l.b16 %v578
        %v611 = vunpack.c.l.b16 %v579
        %v612 = vunpack.c.l.b16 %v580
        %v613 = vunpack.c.l.b16 %v581
        %v614 = vunpack.c.l.b16 %v582
        %v615 = vunpack.c.l.b16 %v583
        %v616 = vunpack.c.l.b16 %v584
        %v617 = vunpack.c.l.b16 %v585
        %v618 = vunpack.c.l.b16 %v586
        %v619 = vpack.c.b16 %v604, %v603
        %v620 = vpack.c.b16 %v606, %v605
        %v621 = vpack.c.b16 %v608, %v607
        %v622 = vpack.c.b16 %v610, %v609
        %v623 = vpack.c.b16 %v612, %v611
        %v624 = vpack.c.b16 %v614, %v613
        %v625 = vpack.c.b16 %v616, %v615
        %v626 = vpack.c.b16 %v618, %v617
        %635 = vmatpush.bf16.msra.mxu0 %v626
        %636 = vmatpush.bf16.msra.mxu0 %v625
        %637 = vmatpush.bf16.msra.mxu0 %v624
        %638 = vmatpush.bf16.msra.mxu0 %v623
        %639 = vmatpush.bf16.msra.mxu0 %v622
        %640 = vmatpush.bf16.msra.mxu0 %v621
        %641 = vmatpush.bf16.msra.mxu0 %v620
        %642 = vmatpush.bf16.msra.mxu0 %v619
        %643 = vmatmul.bf16.gmra.mxu0 %v555
        %v644 = vpop.f32.mrf.mxu0
        %v645 = vadd.f32 0.0, %v644
        %v646 = vpop.f32.mrf.mxu0
        %v647 = vadd.f32 0.0, %v646
        %648 = vmatmul.bf16.gmra.mxu0 %v556
        %v649 = vpop.f32.mrf.mxu0
        %v650 = vadd.f32 0.0, %v649
        %v651 = vpop.f32.mrf.mxu0
        %v652 = vadd.f32 0.0, %v651
        %653 = vmatmul.bf16.gmra.mxu0 %v557
        %v654 = vpop.f32.mrf.mxu0
        %v655 = vadd.f32 0.0, %v654
        %v656 = vpop.f32.mrf.mxu0
        %v657 = vadd.f32 0.0, %v656
        %658 = vmatmul.bf16.gmra.mxu0 %v558
        %v659 = vpop.f32.mrf.mxu0
        %v660 = vadd.f32 0.0, %v659
        %v661 = vpop.f32.mrf.mxu0
        %v662 = vadd.f32 0.0, %v661
        %663 = vmatmul.bf16.gmra.mxu0 %v559
        %v664 = vpop.f32.mrf.mxu0
        %v665 = vadd.f32 0.0, %v664
        %v666 = vpop.f32.mrf.mxu0
        %v667 = vadd.f32 0.0, %v666
        %668 = vmatmul.bf16.gmra.mxu0 %v560
        %v669 = vpop.f32.mrf.mxu0
        %v670 = vadd.f32 0.0, %v669
        %v671 = vpop.f32.mrf.mxu0
        %v672 = vadd.f32 0.0, %v671
        %673 = vmatmul.bf16.gmra.mxu0 %v561
        %v674 = vpop.f32.mrf.mxu0
        %v675 = vadd.f32 0.0, %v674
        %v676 = vpop.f32.mrf.mxu0
        %v677 = vadd.f32 0.0, %v676
        %678 = vmatmul.bf16.gmra.mxu0 %v562
        %v679 = vpop.f32.mrf.mxu0
        %v680 = vadd.f32 0.0, %v679
        %v681 = vpop.f32.mrf.mxu0
        %v682 = vadd.f32 0.0, %v681
        %683 = vmatmul.bf16.gmra.mxu0 %v563
        %v684 = vpop.f32.mrf.mxu0
        %v685 = vadd.f32 0.0, %v684
        %v686 = vpop.f32.mrf.mxu0
        %v687 = vadd.f32 0.0, %v686
        %688 = vmatmul.bf16.gmra.mxu0 %v564
        %v689 = vpop.f32.mrf.mxu0
        %v690 = vadd.f32 0.0, %v689
        %v691 = vpop.f32.mrf.mxu0
        %v692 = vadd.f32 0.0, %v691
        %693 = vmatmul.bf16.gmra.mxu0 %v565
        %v694 = vpop.f32.mrf.mxu0
        %v695 = vadd.f32 0.0, %v694
        %v696 = vpop.f32.mrf.mxu0
        %v697 = vadd.f32 0.0, %v696
        %698 = vmatmul.bf16.gmra.mxu0 %v566
        %v699 = vpop.f32.mrf.mxu0
        %v700 = vadd.f32 0.0, %v699
        %v701 = vpop.f32.mrf.mxu0
        %v702 = vadd.f32 0.0, %v701
        %703 = vmatmul.bf16.gmra.mxu0 %v567
        %v704 = vpop.f32.mrf.mxu0
        %v705 = vadd.f32 0.0, %v704
        %v706 = vpop.f32.mrf.mxu0
        %v707 = vadd.f32 0.0, %v706
        %708 = vmatmul.bf16.gmra.mxu0 %v568
        %v709 = vpop.f32.mrf.mxu0
        %v710 = vadd.f32 0.0, %v709
        %v711 = vpop.f32.mrf.mxu0
        %v712 = vadd.f32 0.0, %v711
        %713 = vmatmul.bf16.gmra.mxu0 %v569
        %v714 = vpop.f32.mrf.mxu0
        %v715 = vadd.f32 0.0, %v714
        %v716 = vpop.f32.mrf.mxu0
        %v717 = vadd.f32 0.0, %v716
        %718 = vmatmul.bf16.gmra.mxu0 %v570
        %v719 = vpop.f32.mrf.mxu0
        %v720 = vadd.f32 0.0, %v719
        %v721 = vpop.f32.mrf.mxu0
        %v722 = vadd.f32 0.0, %v721
        %723 = vdwg.mxu0
        %v740 = vunpack.c.l.b16 %v507
        %v741 = vunpack.c.l.b16 %v508
        %v742 = vunpack.c.l.b16 %v509
        %v743 = vunpack.c.l.b16 %v510
        %v744 = vunpack.c.l.b16 %v511
        %v745 = vunpack.c.l.b16 %v512
        %v746 = vunpack.c.l.b16 %v513
        %v747 = vunpack.c.l.b16 %v514
        %v748 = vunpack.c.l.b16 %v515
        %v749 = vunpack.c.l.b16 %v516
        %v750 = vunpack.c.l.b16 %v517
        %v751 = vunpack.c.l.b16 %v518
        %v752 = vunpack.c.l.b16 %v519
        %v753 = vunpack.c.l.b16 %v520
        %v754 = vunpack.c.l.b16 %v521
        %v755 = vunpack.c.l.b16 %v522
        %v756 = vpack.c.b16 %v741, %v740
        %v757 = vpack.c.b16 %v743, %v742
        %v758 = vpack.c.b16 %v745, %v744
        %v759 = vpack.c.b16 %v747, %v746
        %v760 = vpack.c.b16 %v749, %v748
        %v761 = vpack.c.b16 %v751, %v750
        %v762 = vpack.c.b16 %v753, %v752
        %v763 = vpack.c.b16 %v755, %v754
        %772 = vmatpush.bf16.msra.mxu0 %v763
        %773 = vmatpush.bf16.msra.mxu0 %v762
        %774 = vmatpush.bf16.msra.mxu0 %v761
        %775 = vmatpush.bf16.msra.mxu0 %v760
        %776 = vmatpush.bf16.msra.mxu0 %v759
        %777 = vmatpush.bf16.msra.mxu0 %v758
        %778 = vmatpush.bf16.msra.mxu0 %v757
        %779 = vmatpush.bf16.msra.mxu0 %v756
        %780 = vmatmul.bf16.gmra.mxu0 %v491
        %v781 = vpop.f32.mrf.mxu0
        %v782 = vadd.f32 %v645, %v781
        %v783 = vpop.f32.mrf.mxu0
        %v784 = vadd.f32 %v647, %v783
        %785 = vmatmul.bf16.gmra.mxu0 %v492
        %v786 = vpop.f32.mrf.mxu0
        %v787 = vadd.f32 %v650, %v786
        %v788 = vpop.f32.mrf.mxu0
        %v789 = vadd.f32 %v652, %v788
        %790 = vmatmul.bf16.gmra.mxu0 %v493
        %v791 = vpop.f32.mrf.mxu0
        %v792 = vadd.f32 %v655, %v791
        %v793 = vpop.f32.mrf.mxu0
        %v794 = vadd.f32 %v657, %v793
        %795 = vmatmul.bf16.gmra.mxu0 %v494
        %v796 = vpop.f32.mrf.mxu0
        %v797 = vadd.f32 %v660, %v796
        %v798 = vpop.f32.mrf.mxu0
        %v799 = vadd.f32 %v662, %v798
        %800 = vmatmul.bf16.gmra.mxu0 %v495
        %v801 = vpop.f32.mrf.mxu0
        %v802 = vadd.f32 %v665, %v801
        %v803 = vpop.f32.mrf.mxu0
        %v804 = vadd.f32 %v667, %v803
        %805 = vmatmul.bf16.gmra.mxu0 %v496
        %v806 = vpop.f32.mrf.mxu0
        %v807 = vadd.f32 %v670, %v806
        %v808 = vpop.f32.mrf.mxu0
        %v809 = vadd.f32 %v672, %v808
        %810 = vmatmul.bf16.gmra.mxu0 %v497
        %v811 = vpop.f32.mrf.mxu0
        %v812 = vadd.f32 %v675, %v811
        %v813 = vpop.f32.mrf.mxu0
        %v814 = vadd.f32 %v677, %v813
        %815 = vmatmul.bf16.gmra.mxu0 %v498
        %v816 = vpop.f32.mrf.mxu0
        %v817 = vadd.f32 %v680, %v816
        %v818 = vpop.f32.mrf.mxu0
        %v819 = vadd.f32 %v682, %v818
        %820 = vmatmul.bf16.gmra.mxu0 %v499
        %v821 = vpop.f32.mrf.mxu0
        %v822 = vadd.f32 %v685, %v821
        %v823 = vpop.f32.mrf.mxu0
        %v824 = vadd.f32 %v687, %v823
        %825 = vmatmul.bf16.gmra.mxu0 %v500
        %v826 = vpop.f32.mrf.mxu0
        %v827 = vadd.f32 %v690, %v826
        %v828 = vpop.f32.mrf.mxu0
        %v829 = vadd.f32 %v692, %v828
        %830 = vmatmul.bf16.gmra.mxu0 %v501
        %v831 = vpop.f32.mrf.mxu0
        %v832 = vadd.f32 %v695, %v831
        %v833 = vpop.f32.mrf.mxu0
        %v834 = vadd.f32 %v697, %v833
        %835 = vmatmul.bf16.gmra.mxu0 %v502
        %v836 = vpop.f32.mrf.mxu0
        %v837 = vadd.f32 %v700, %v836
        %v838 = vpop.f32.mrf.mxu0
        %v839 = vadd.f32 %v702, %v838
        %840 = vmatmul.bf16.gmra.mxu0 %v503
        %v841 = vpop.f32.mrf.mxu0
        %v842 = vadd.f32 %v705, %v841
        %v843 = vpop.f32.mrf.mxu0
        %v844 = vadd.f32 %v707, %v843
        %845 = vmatmul.bf16.gmra.mxu0 %v504
        %v846 = vpop.f32.mrf.mxu0
        %v847 = vadd.f32 %v710, %v846
        %v848 = vpop.f32.mrf.mxu0
        %v849 = vadd.f32 %v712, %v848
        %850 = vmatmul.bf16.gmra.mxu0 %v505
        %v851 = vpop.f32.mrf.mxu0
        %v852 = vadd.f32 %v715, %v851
        %v853 = vpop.f32.mrf.mxu0
        %v854 = vadd.f32 %v717, %v853
        %855 = vmatmul.bf16.gmra.mxu0 %v506
        %v856 = vpop.f32.mrf.mxu0
        %v857 = vadd.f32 %v720, %v856
        %v858 = vpop.f32.mrf.mxu0
        %v859 = vadd.f32 %v722, %v858
        %860 = vdwg.mxu0
        %861 = vst [vmem:[%s301] sm:$0xff] %v782
        %862 = vst [vmem:[%s301 + $0x8] sm:$0xff] %v784
        %863 = vst [vmem:[%s301 + $0x10] sm:$0xff] %v787
        %864 = vst [vmem:[%s301 + $0x18] sm:$0xff] %v789
        %865 = vst [vmem:[%s301 + $0x20] sm:$0xff] %v792
        %866 = vst [vmem:[%s301 + $0x28] sm:$0xff] %v794
        %867 = vst [vmem:[%s301 + $0x30] sm:$0xff] %v797
        %868 = vst [vmem:[%s301 + $0x38] sm:$0xff] %v799
        %869 = vst [vmem:[%s301 + $0x40] sm:$0xff] %v802
        %870 = vst [vmem:[%s301 + $0x48] sm:$0xff] %v804
        %871 = vst [vmem:[%s301 + $0x50] sm:$0xff] %v807
        %872 = vst [vmem:[%s301 + $0x58] sm:$0xff] %v809
        %873 = vst [vmem:[%s301 + $0x60] sm:$0xff] %v812
        %874 = vst [vmem:[%s301 + $0x68] sm:$0xff] %v814
        %875 = vst [vmem:[%s301 + $0x70] sm:$0xff] %v817
        %876 = vst [vmem:[%s301 + $0x78] sm:$0xff] %v819
        %877 = vst [vmem:[%s301 + $0x80] sm:$0xff] %v822
        %878 = vst [vmem:[%s301 + $0x88] sm:$0xff] %v824
        %879 = vst [vmem:[%s301 + $0x90] sm:$0xff] %v827
        %880 = vst [vmem:[%s301 + $0x98] sm:$0xff] %v829
        %881 = vst [vmem:[%s301 + $0xa0] sm:$0xff] %v832
        %882 = vst [vmem:[%s301 + $0xa8] sm:$0xff] %v834
        %883 = vst [vmem:[%s301 + $0xb0] sm:$0xff] %v837
        %884 = vst [vmem:[%s301 + $0xb8] sm:$0xff] %v839
        %885 = vst [vmem:[%s301 + $0xc0] sm:$0xff] %v842
        %886 = vst [vmem:[%s301 + $0xc8] sm:$0xff] %v844
        %887 = vst [vmem:[%s301 + $0xd0] sm:$0xff] %v847
        %888 = vst [vmem:[%s301 + $0xd8] sm:$0xff] %v849
        %889 = vst [vmem:[%s301 + $0xe0] sm:$0xff] %v852
        %890 = vst [vmem:[%s301 + $0xe8] sm:$0xff] %v854
        %891 = vst [vmem:[%s301 + $0xf0] sm:$0xff] %v857
        %892 = vst [vmem:[%s301 + $0xf8] sm:$0xff] %v859
        %s893 = sand.u32 %s188, 1
        %s894 = scalar_lea.sflag [#allocation3], %s893
        %s895 = sand.u32 %s188, 1
        %s896 = smul.addr %s895, 256
        %s897 = scalar_lea.vmem [#allocation2], %s896
        // Predicated region
        $region45: #{transition_up_forward.3} parent=43 // pred_check
          %p898 = pneg %p198
        $region46: #{transition_up_forward.3} parent=43 // pred_check_branch
          %900 = sbr.rel (%p898) target = $region48
        $region47: #{transition_up_forward.3} parent=43 // pred_region
          %s901 = smul.u32 32, %s24
          %903 = vsyncadd %s894, 0
          %s904 = sadd.s32 %s25, %s901
          %s905 = smul.addr %s904, 8
          %s906 = scalar_lea.hbm %s6, %s905
          %s907 = sshll.u32 %s897, 4
          %s908 = int_to_ptr.vmem [resolvable:$true] %s907
          %s909 = sshll.u32 %s906, 4
          %s910 = int_to_ptr.hbm [resolvable:$true] %s909
          %915 = dma.vmem_to_hbm [thread:$0]  %s908, 4096, %s910, %s894, 128, 128, 8
        $region48: #{transition_up_forward.3} parent=43 // pred_fallthru
          _
      $region44: #{transition_up_forward.3} parent=5 // pred_fallthru
        _
      %p916 = scmp.le.s32.totalorder 2, %s15
      // Predicated region
      $region49: #{transition_up_forward.3} parent=5 // pred_check
        %p917 = pneg %p916
      $region50: #{transition_up_forward.3} parent=5 // pred_check_branch
        %919 = sbr.rel (%p917) target = $region52
      $region51: #{transition_up_forward.3} parent=5 // pred_region
        %s920 = ssub.s32 %s15, 2
        // Predicated region
        $region53: #{transition_up_forward.3} parent=51 // pred_check
          %p921 = pneg %p204
        $region54: #{transition_up_forward.3} parent=51 // pred_check_branch
          %923 = sbr.rel (%p921) target = $region56
        $region55: #{transition_up_forward.3} parent=51 // pred_region
          %s924 = sand.u32 %s189, 1
          %s925 = scalar_lea.sflag [#allocation3], %s924
          %s926 = sand.u32 %s189, 1
          %s927 = smul.addr %s926, 256
          %s928 = scalar_lea.vmem [#allocation2], %s927
          %930 = dma.done %s925, 4096
        $region56: #{transition_up_forward.3} parent=51 // pred_fallthru
          _
      $region52: #{transition_up_forward.3} parent=5 // pred_fallthru
        _
    $region6: #{transition_up_forward.3} parent=1 // loop_footer
      %s19 = sadd.s32 1, %s15
    $region7: #{transition_up_forward.3} parent=1 // loop_footer_branch
      %14 = sbr.rel target = $region3
    $region8: #{transition_up_forward.3} parent=1 // loop_exit
      _
    %931 = vsyncpa [#allocation3], 1
    %s932 = scalar_lea.sflag [#allocation3], 1
    %933 = vsyncpa %s932, 1

</llo_original>
